<compile_context>
chip_gen: v7x
topology: tpu7x:2x2x1
jax: 0.10.0
libtpu: 0.0.40
codegen_flags: <defaults>
</compile_context>

<pallas_src>
import functools
import math

import numpy as np
import jax
import jax.numpy as jnp
from jax.experimental import pallas as pl
from jax.experimental.pallas import tpu as pltpu

LOG_SIG_MIN, LOG_SIG_MAX = -20.0, 2.0


def _pack_rows_aligned(mats, align=8):
    """Stack 2-D matrices along rows, padding every section to a multiple of
    `align` rows so in-kernel static sub-views start on sublane-tile
    boundaries.  Returns (slab, per-section row offsets)."""
    cols = mats[0].shape[1]
    parts, offsets, off = [], [], 0
    for m in mats:
        offsets.append(off)
        r = m.shape[0]
        pad = (-r) % align
        parts.append(m)
        if pad:
            parts.append(jnp.zeros((pad, cols), m.dtype))
        off += r + pad
    return jnp.concatenate(parts, axis=0), tuple(offsets)


# ----------------------------------------------------------------------------
# Fused per-task kernel: psi encoder + PoG posterior + rsample + TanhGaussian
# ----------------------------------------------------------------------------
def _pearl_task_kernel(
    ctx_ref, obs_ref, eps_z_ref, eps_a_ref,
    w_hid_ref, w_ehead_ref, w_phead_ref,
    b_hid_ref, b_ehead_ref, b_phead_ref,
    z_slab_ref, pol_slab_ref,
    *, ctx_dim, obs_dim, hidden, latent_dim, action_dim,
    w_hid_offs, w_ehead_offs, w_phead_offs,
):
    f32, bf16 = jnp.float32, jnp.bfloat16
    H, L, A = hidden, latent_dim, action_dim

    def mm(x, w):
        # bf16 operands, f32 accumulation on the MXU
        return jnp.dot(x.astype(bf16), w, preferred_element_type=f32)

    # static, sublane-aligned sub-views of the packed bf16 weight slab
    o_ew1, o_ew2, o_ew3, o_pw1o, o_pw1z, o_pw2, o_pw3 = w_hid_offs
    ew1 = w_hid_ref[o_ew1:o_ew1 + ctx_dim, :]
    ew2 = w_hid_ref[o_ew2:o_ew2 + H, :]
    ew3 = w_hid_ref[o_ew3:o_ew3 + H, :]
    pw1o = w_hid_ref[o_pw1o:o_pw1o + obs_dim, :]
    pw1z = w_hid_ref[o_pw1z:o_pw1z + L, :]
    pw2 = w_hid_ref[o_pw2:o_pw2 + H, :]
    pw3 = w_hid_ref[o_pw3:o_pw3 + H, :]
    o_mu, o_pre = w_ehead_offs
    o_mean, o_lstd = w_phead_offs

    # ---- psi context encoder for this task's n context rows ----
    x = ctx_ref[...]                                          # (n, ctx_dim)
    h = jnp.maximum(mm(x, ew1) + b_hid_ref[0:1, :], 0.0)
    h = jnp.maximum(mm(h, ew2) + b_hid_ref[1:2, :], 0.0)
    h = jnp.maximum(mm(h, ew3) + b_hid_ref[2:3, :], 0.0)
    mu = mm(h, w_ehead_ref[o_mu:o_mu + H, :]) + b_ehead_ref[0:1, :]      # (n, L)
    pre = mm(h, w_ehead_ref[o_pre:o_pre + H, :]) + b_ehead_ref[1:2, :]   # (n, L)

    # F.softplus (threshold=20) then torch.clamp(min=1e-7)
    sig2 = jnp.where(pre > 20.0, pre,
                     jnp.log1p(jnp.exp(jnp.minimum(pre, 20.0))))
    sig2 = jnp.maximum(sig2, 1e-7)

    # product of Gaussians over the n context rows — exact f32 division
    # (tiny arrays; keeps z_means / z_vars close to the torch reference)
    inv = 1.0 / sig2
    sum_inv = jnp.sum(inv, axis=0, keepdims=True)             # (1, L)
    z_vars = 1.0 / sum_inv
    z_means = z_vars * jnp.sum(mu * inv, axis=0, keepdims=True)
    z = z_means + jnp.sqrt(z_vars) * eps_z_ref[...]           # rsample, (1, L)

    # single lane-contiguous store: [z_means | z_vars | z]
    z_slab_ref[...] = jnp.concatenate([z_means, z_vars, z], axis=-1)

    # ---- TanhGaussian policy on [obs, task_z] ----
    # repeat+concat fused as a broadcast add: h1 = obs @ W1_obs + z @ W1_z + b1
    obs = obs_ref[...]                                        # (b, obs_dim)
    h = jnp.maximum(mm(obs, pw1o) + mm(z, pw1z) + b_hid_ref[3:4, :], 0.0)
    h = jnp.maximum(mm(h, pw2) + b_hid_ref[4:5, :], 0.0)
    h = jnp.maximum(mm(h, pw3) + b_hid_ref[5:6, :], 0.0)

    mean = mm(h, w_phead_ref[o_mean:o_mean + H, :]) + b_phead_ref[0:1, :]
    log_std = mm(h, w_phead_ref[o_lstd:o_lstd + H, :]) + b_phead_ref[1:2, :]
    log_std = jnp.clip(log_std, LOG_SIG_MIN, LOG_SIG_MAX)
    std = jnp.exp(log_std)

    eps = eps_a_ref[...]                                      # (b, A)
    pre_tanh = mean + std * eps                               # rsample
    action = jnp.tanh(pre_tanh)

    # Normal(mean, std).log_prob(pre_tanh) == -eps^2/2 - log_std - 0.5*log(2*pi)
    normal_lp = -0.5 * eps * eps - log_std - 0.5 * math.log(2.0 * math.pi)
    corrected = normal_lp - jnp.log(1.0 - action * action + 1e-6)
    log_prob = jnp.sum(corrected, axis=1, keepdims=True)      # (b, 1)

    # single lane-contiguous store:
    # [action | mean | log_std | std | pre_tanh | log_prob]
    pol_slab_ref[...] = jnp.concatenate(
        [action, mean, log_std, std, pre_tanh, log_prob], axis=-1)


# ----------------------------------------------------------------------------
# PEARLAgent.forward wrapper (use_ib=True, which_enc='psi')
# ----------------------------------------------------------------------------
def _sample_eps(rng, t, b, latent_dim, action_dim):
    k_z, k_a = jax.random.split(rng)
    eps_z = jax.random.normal(k_z, (t, 1, latent_dim), jnp.float32)
    eps_a = jax.random.normal(k_a, (t, b, action_dim), jnp.float32)
    return eps_z, eps_a


def pearl_agent_forward(obs, context, psi_params, policy_params, latent_dim, rng):
    t, n, ctx_dim = context.shape
    _, b, obs_dim = obs.shape
    L = latent_dim

    (ew1, eb1), (ew2, eb2), (ew3, eb3), (ewo, ebo) = psi_params
    (pw1, pb1), (pw2, pb2), (pw3, pb3), (pwm, pbm), (pws, pbs) = policy_params
    hidden = pw2.shape[0]
    action_dim = pwm.shape[1]
    A = action_dim

    # ---- static weight preprocessing (free under jit) ----
    pw1o = pw1[:obs_dim, :]              # obs rows of the first policy layer
    pw1z = pw1[obs_dim:, :]              # latent rows of the first policy layer
    ewo_mu, ewo_pre = ewo[:, :L], ewo[:, L:]      # lane-aligned head splits
    ebo_mu, ebo_pre = ebo[:, :L], ebo[:, L:]

    bf = lambda x: x.astype(jnp.bfloat16)
    # one bf16 slab for every hidden-width matrix (1 DMA instead of 7)
    w_hid, w_hid_offs = _pack_rows_aligned(
        [bf(ew1), bf(ew2), bf(ew3), bf(pw1o), bf(pw1z), bf(pw2), bf(pw3)])
    w_ehead, w_ehead_offs = _pack_rows_aligned([bf(ewo_mu), bf(ewo_pre)])
    w_phead, w_phead_offs = _pack_rows_aligned([bf(pwm), bf(pws)])
    # f32 bias slabs (row i = bias of layer i)
    b_hid = jnp.concatenate([eb1, eb2, eb3, pb1, pb2, pb3], axis=0)   # (6, H)
    b_ehead = jnp.concatenate([ebo_mu, ebo_pre], axis=0)              # (2, L)
    b_phead = jnp.concatenate([pbm, pbs], axis=0)                     # (2, A)
    # TODO(synk): at production sizes also zero-pad `hidden` to the MXU tile
    # (128 on v5e, 256 on v6e/v7x) in this packing step.

    eps_z, eps_a = _sample_eps(rng, t, b, L, A)

    kernel = functools.partial(
        _pearl_task_kernel,
        ctx_dim=ctx_dim, obs_dim=obs_dim, hidden=hidden,
        latent_dim=L, action_dim=A,
        w_hid_offs=w_hid_offs, w_ehead_offs=w_ehead_offs,
        w_phead_offs=w_phead_offs)

    def full(x):  # resident param block: constant index_map -> DMA'd once
        return pl.BlockSpec(x.shape, lambda i: (0,) * x.ndim)

    in_specs = [
        pl.BlockSpec((None, n, ctx_dim), lambda i: (i, 0, 0)),      # context (per task)
        pl.BlockSpec((None, b, obs_dim), lambda i: (i, 0, 0)),      # obs     (per task)
        pl.BlockSpec((None, 1, L), lambda i: (i, 0, 0)),            # eps_z   (per task)
        pl.BlockSpec((None, b, A), lambda i: (i, 0, 0)),            # eps_a   (per task)
        full(w_hid), full(w_ehead), full(w_phead),
        full(b_hid), full(b_ehead), full(b_phead),
    ]
    out_specs = (
        pl.BlockSpec((None, 1, 3 * L), lambda i: (i, 0, 0)),        # z slab
        pl.BlockSpec((None, b, 5 * A + 1), lambda i: (i, 0, 0)),    # policy slab
    )
    out_shape = (
        jax.ShapeDtypeStruct((t, 1, 3 * L), jnp.float32),
        jax.ShapeDtypeStruct((t, b, 5 * A + 1), jnp.float32),
    )

    z_slab, pol_slab = pl.pallas_call(
        kernel,
        grid=(t,),
        in_specs=in_specs,
        out_specs=out_specs,
        out_shape=out_shape,
        compiler_params=pltpu.CompilerParams(
            dimension_semantics=("parallel",),          # tasks split across TCs on v7x
            vmem_limit_bytes=32 * 1024 * 1024),         # explicit scoped-VMEM budget
    )(context, obs, eps_z, eps_a, w_hid, w_ehead, w_phead, b_hid, b_ehead, b_phead)

    z_means = z_slab[:, 0, 0 * L:1 * L]
    z_vars = z_slab[:, 0, 1 * L:2 * L]
    z = z_slab[:, 0, 2 * L:3 * L]
    task_z = jnp.repeat(z, b, axis=0)                   # (t*b, L), as in the reference

    flat = pol_slab.reshape(t * b, 5 * A + 1)
    action = flat[:, 0 * A:1 * A]
    mean = flat[:, 1 * A:2 * A]
    log_std = flat[:, 2 * A:3 * A]
    std = flat[:, 3 * A:4 * A]
    pre_tanh = flat[:, 4 * A:5 * A]
    log_prob = flat[:, 5 * A:5 * A + 1]

    # rlkit TanhGaussianPolicy returns entropy / mean_action_log_prob as None here
    policy_outputs = (action, mean, log_std, log_prob, None, std, None, pre_tanh)
    return policy_outputs, task_z, z_means, z_vars


# ----------------------------------------------------------------------------
# Pure-f32 JAX reference (same math, no Pallas) — for tolerance validation
# ----------------------------------------------------------------------------
def pearl_reference(obs, context, psi_params, policy_params, latent_dim, eps_z, eps_a):
    t, n, _ = context.shape
    _, b, _ = obs.shape
    L = latent_dim
    (ew1, eb1), (ew2, eb2), (ew3, eb3), (ewo, ebo) = psi_params
    (pw1, pb1), (pw2, pb2), (pw3, pb3), (pwm, pbm), (pws, pbs) = policy_params

    x = context.reshape(t * n, -1)
    h = jax.nn.relu(x @ ew1 + eb1)
    h = jax.nn.relu(h @ ew2 + eb2)
    h = jax.nn.relu(h @ ew3 + eb3)
    enc = h @ ewo + ebo
    mu = enc[:, :L].reshape(t, n, L)
    sig2 = jnp.maximum(jax.nn.softplus(enc[:, L:]), 1e-7).reshape(t, n, L)
    z_vars = 1.0 / jnp.sum(1.0 / sig2, axis=1)
    z_means = z_vars * jnp.sum(mu / sig2, axis=1)
    z = z_means + jnp.sqrt(z_vars) * eps_z.reshape(t, L)
    task_z = jnp.repeat(z, b, axis=0)

    in_ = jnp.concatenate([obs.reshape(t * b, -1), task_z], axis=1)
    h = jax.nn.relu(in_ @ pw1 + pb1)
    h = jax.nn.relu(h @ pw2 + pb2)
    h = jax.nn.relu(h @ pw3 + pb3)
    mean = h @ pwm + pbm
    log_std = jnp.clip(h @ pws + pbs, LOG_SIG_MIN, LOG_SIG_MAX)
    std = jnp.exp(log_std)
    eps = eps_a.reshape(t * b, -1)
    pre_tanh = mean + std * eps
    action = jnp.tanh(pre_tanh)
    normal_lp = -0.5 * eps * eps - log_std - 0.5 * math.log(2.0 * math.pi)
    log_prob = jnp.sum(normal_lp - jnp.log(1.0 - action * action + 1e-6),
                       axis=1, keepdims=True)
    return action, mean, log_std, log_prob, std, pre_tanh, task_z, z_means, z_vars


# ----------------------------------------------------------------------------
# Deterministic parameter init (PyTorch nn.Linear-style uniform fan-in bounds)
# ----------------------------------------------------------------------------
def init_mlp(key, sizes):
    layers = []
    for din, dout in zip(sizes[:-1], sizes[1:]):
        key, kw, kb = jax.random.split(key, 3)
        bound = 1.0 / math.sqrt(din)
        w = jax.random.uniform(kw, (din, dout), jnp.float32, -bound, bound)
        b = jax.random.uniform(kb, (1, dout), jnp.float32, -bound, bound)
        layers.append((w, b))
    return layers


if __name__ == "__main__":
    key = jax.random.PRNGKey(0)
    t, b, n = 2, 8, 8                      # tasks, policy batch per task, context len
    obs_dim, action_dim, latent_dim, hidden = 16, 4, 8, 32
    ctx_dim = obs_dim + action_dim + 1     # use_next_obs_in_context = False

    kobs, kctx, kpsi, kpol, kheads, ksample = jax.random.split(key, 6)
    obs = jax.random.normal(kobs, (t, b, obs_dim), jnp.float32)
    context = jax.random.normal(kctx, (t, n, ctx_dim), jnp.float32)

    # psi encoder: ctx_dim -> hidden x3 -> 2*latent_dim (mu | pre-softplus sigma^2)
    psi_params = init_mlp(kpsi, [ctx_dim, hidden, hidden, hidden, 2 * latent_dim])

    # TanhGaussianPolicy: (obs_dim+latent) -> hidden x3 -> {mean, log_std} heads
    trunk = init_mlp(kpol, [obs_dim + latent_dim, hidden, hidden, hidden])
    kmean, klogstd = jax.random.split(kheads)
    mean_head = init_mlp(kmean, [hidden, action_dim])[0]
    logstd_head = init_mlp(klogstd, [hidden, action_dim])[0]
    policy_params = trunk + [mean_head, logstd_head]

    forward = jax.jit(pearl_agent_forward, static_argnums=4)
    policy_outputs, task_z, z_means, z_vars = forward(
        obs, context, psi_params, policy_params, latent_dim, ksample)
    jax.block_until_ready(policy_outputs[0])   # action
    jax.block_until_ready(policy_outputs[3])   # log_prob
    jax.block_until_ready(task_z)
    jax.block_until_ready(z_means)
    jax.block_until_ready(z_vars)

    # tolerance check of the bf16-MXU kernel against a pure-f32 JAX reference
    eps_z, eps_a = _sample_eps(ksample, t, b, latent_dim, action_dim)
    ref = pearl_reference(obs, context, psi_params, policy_params,
                          latent_dim, eps_z, eps_a)

    def chk(a, r, atol):
        np.testing.assert_allclose(np.asarray(a), np.asarray(r), rtol=0.0, atol=atol)

    chk(policy_outputs[0], ref[0], 0.08)   # action
    chk(policy_outputs[1], ref[1], 0.08)   # mean
    chk(policy_outputs[2], ref[2], 0.08)   # log_std
    chk(policy_outputs[3], ref[3], 0.25)   # log_prob (sums per-dim errors)
    chk(policy_outputs[5], ref[4], 0.08)   # std
    chk(policy_outputs[7], ref[5], 0.08)   # pre_tanh
    chk(task_z, ref[6], 0.03)
    chk(z_means, ref[7], 0.03)
    chk(z_vars, ref[8], 0.03)

    # TODO(synk): stateful pieces (TaskCBuffer, Dirichlet exploration, clear_z /
    # update_context bookkeeping) are host-side control logic with no kernel analogue.
    print("KERNEL_OK")
</pallas_src>

<mosaic_0001>
module attributes {stable_mosaic.version = 11 : i64} {
  func.func @_pearl_task_kernel(%arg0: i32, %arg1: memref<1x8x21xf32, #tpu.memory_space<vmem>>, %arg2: memref<1x8x16xf32, #tpu.memory_space<vmem>>, %arg3: memref<1x1x8xf32, #tpu.memory_space<vmem>>, %arg4: memref<1x8x4xf32, #tpu.memory_space<vmem>>, %arg5: memref<176x32xbf16, #tpu.memory_space<vmem>>, %arg6: memref<64x8xbf16, #tpu.memory_space<vmem>>, %arg7: memref<64x4xbf16, #tpu.memory_space<vmem>>, %arg8: memref<6x32xf32, #tpu.memory_space<vmem>>, %arg9: memref<2x8xf32, #tpu.memory_space<vmem>>, %arg10: memref<2x4xf32, #tpu.memory_space<vmem>>, %arg11: memref<1x1x24xf32, #tpu.memory_space<vmem>>, %arg12: memref<1x8x21xf32, #tpu.memory_space<vmem>>) attributes {dimension_semantics = [#tpu.dimension_semantics<parallel>], iteration_bounds = array<i64: 2>, scalar_prefetch = 0 : i64, scratch_operands = 0 : i64, tpu.core_type = #tpu.core_type<tc>, window_params = [{transform_indices = @transform_0, window_bounds = array<i64: 1, 8, 21>}, {transform_indices = @transform_1, window_bounds = array<i64: 1, 8, 16>}, {transform_indices = @transform_2, window_bounds = array<i64: 1, 1, 8>}, {transform_indices = @transform_3, window_bounds = array<i64: 1, 8, 4>}, {pipeline_mode = #tpu.pipeline_mode<synchronous>, transform_indices = @transform_4, window_bounds = array<i64: 176, 32>}, {pipeline_mode = #tpu.pipeline_mode<synchronous>, transform_indices = @transform_5, window_bounds = array<i64: 64, 8>}, {pipeline_mode = #tpu.pipeline_mode<synchronous>, transform_indices = @transform_6, window_bounds = array<i64: 64, 4>}, {pipeline_mode = #tpu.pipeline_mode<synchronous>, transform_indices = @transform_7, window_bounds = array<i64: 6, 32>}, {pipeline_mode = #tpu.pipeline_mode<synchronous>, transform_indices = @transform_8, window_bounds = array<i64: 2, 8>}, {pipeline_mode = #tpu.pipeline_mode<synchronous>, transform_indices = @transform_9, window_bounds = array<i64: 2, 4>}, {transform_indices = @transform_10, window_bounds = array<i64: 1, 1, 24>}, {transform_indices = @transform_11, window_bounds = array<i64: 1, 8, 21>}]} {
    %c0 = arith.constant 0 : index
    %c0_0 = arith.constant 0 : index
    %0 = vector.load %arg5[%c0, %c0_0] : memref<176x32xbf16, #tpu.memory_space<vmem>>, vector<21x32xbf16>
    %c24 = arith.constant 24 : index
    %c0_1 = arith.constant 0 : index
    %1 = vector.load %arg5[%c24, %c0_1] : memref<176x32xbf16, #tpu.memory_space<vmem>>, vector<32x32xbf16>
    %c56 = arith.constant 56 : index
    %c0_2 = arith.constant 0 : index
    %2 = vector.load %arg5[%c56, %c0_2] : memref<176x32xbf16, #tpu.memory_space<vmem>>, vector<32x32xbf16>
    %c88 = arith.constant 88 : index
    %c0_3 = arith.constant 0 : index
    %3 = vector.load %arg5[%c88, %c0_3] : memref<176x32xbf16, #tpu.memory_space<vmem>>, vector<16x32xbf16>
    %c104 = arith.constant 104 : index
    %c0_4 = arith.constant 0 : index
    %4 = vector.load %arg5[%c104, %c0_4] : memref<176x32xbf16, #tpu.memory_space<vmem>>, vector<8x32xbf16>
    %c112 = arith.constant 112 : index
    %c0_5 = arith.constant 0 : index
    %5 = vector.load %arg5[%c112, %c0_5] : memref<176x32xbf16, #tpu.memory_space<vmem>>, vector<32x32xbf16>
    %c144 = arith.constant 144 : index
    %c0_6 = arith.constant 0 : index
    %6 = vector.load %arg5[%c144, %c0_6] : memref<176x32xbf16, #tpu.memory_space<vmem>>, vector<32x32xbf16>
    %c0_7 = arith.constant 0 : index
    %c0_8 = arith.constant 0 : index
    %c0_9 = arith.constant 0 : index
    %7 = vector.load %arg1[%c0_7, %c0_8, %c0_9] : memref<1x8x21xf32, #tpu.memory_space<vmem>>, vector<1x8x21xf32>
    %8 = vector.shape_cast %7 : vector<1x8x21xf32> to vector<8x21xf32>
    %9 = arith.truncf %8 : vector<8x21xf32> to vector<8x21xbf16>
    %cst = arith.constant dense<0.000000e+00> : vector<8x32xf32>
    %10 = tpu.matmul %9, %0, %cst {dimension_numbers = #tpu.dot_dimension_numbers<[1], [0], [0], [1], [0, 0, 1, 1], [], []>} : vector<8x21xbf16>, vector<21x32xbf16>, vector<8x32xf32> -> vector<8x32xf32>
    %c0_10 = arith.constant 0 : index
    %c0_11 = arith.constant 0 : index
    %11 = vector.load %arg8[%c0_10, %c0_11] : memref<6x32xf32, #tpu.memory_space<vmem>>, vector<1x32xf32>
    %12 = vector.broadcast %11 : vector<1x32xf32> to vector<8x32xf32>
    %13 = arith.addf %10, %12 : vector<8x32xf32>
    %cst_12 = arith.constant 0.000000e+00 : f32
    %14 = vector.broadcast %cst_12 : f32 to vector<8x32xf32>
    %15 = arith.maximumf %13, %14 : vector<8x32xf32>
    %16 = arith.truncf %15 : vector<8x32xf32> to vector<8x32xbf16>
    %cst_13 = arith.constant dense<0.000000e+00> : vector<8x32xf32>
    %17 = tpu.matmul %16, %1, %cst_13 {dimension_numbers = #tpu.dot_dimension_numbers<[1], [0], [0], [1], [0, 0, 1, 1], [], []>} : vector<8x32xbf16>, vector<32x32xbf16>, vector<8x32xf32> -> vector<8x32xf32>
    %c1 = arith.constant 1 : index
    %c0_14 = arith.constant 0 : index
    %18 = vector.load %arg8[%c1, %c0_14] : memref<6x32xf32, #tpu.memory_space<vmem>>, vector<1x32xf32>
    %19 = vector.broadcast %18 : vector<1x32xf32> to vector<8x32xf32>
    %20 = arith.addf %17, %19 : vector<8x32xf32>
    %cst_15 = arith.constant 0.000000e+00 : f32
    %21 = vector.broadcast %cst_15 : f32 to vector<8x32xf32>
    %22 = arith.maximumf %20, %21 : vector<8x32xf32>
    %23 = arith.truncf %22 : vector<8x32xf32> to vector<8x32xbf16>
    %cst_16 = arith.constant dense<0.000000e+00> : vector<8x32xf32>
    %24 = tpu.matmul %23, %2, %cst_16 {dimension_numbers = #tpu.dot_dimension_numbers<[1], [0], [0], [1], [0, 0, 1, 1], [], []>} : vector<8x32xbf16>, vector<32x32xbf16>, vector<8x32xf32> -> vector<8x32xf32>
    %c2 = arith.constant 2 : index
    %c0_17 = arith.constant 0 : index
    %25 = vector.load %arg8[%c2, %c0_17] : memref<6x32xf32, #tpu.memory_space<vmem>>, vector<1x32xf32>
    %26 = vector.broadcast %25 : vector<1x32xf32> to vector<8x32xf32>
    %27 = arith.addf %24, %26 : vector<8x32xf32>
    %cst_18 = arith.constant 0.000000e+00 : f32
    %28 = vector.broadcast %cst_18 : f32 to vector<8x32xf32>
    %29 = arith.maximumf %27, %28 : vector<8x32xf32>
    %c0_19 = arith.constant 0 : index
    %c0_20 = arith.constant 0 : index
    %30 = vector.load %arg6[%c0_19, %c0_20] : memref<64x8xbf16, #tpu.memory_space<vmem>>, vector<32x8xbf16>
    %31 = arith.truncf %29 : vector<8x32xf32> to vector<8x32xbf16>
    %cst_21 = arith.constant dense<0.000000e+00> : vector<8x8xf32>
    %32 = tpu.matmul %31, %30, %cst_21 {dimension_numbers = #tpu.dot_dimension_numbers<[1], [0], [0], [1], [0, 0, 1, 1], [], []>} : vector<8x32xbf16>, vector<32x8xbf16>, vector<8x8xf32> -> vector<8x8xf32>
    %c0_22 = arith.constant 0 : index
    %c0_23 = arith.constant 0 : index
    %33 = vector.load %arg9[%c0_22, %c0_23] : memref<2x8xf32, #tpu.memory_space<vmem>>, vector<1x8xf32>
    %34 = vector.broadcast %33 : vector<1x8xf32> to vector<8x8xf32>
    %35 = arith.addf %32, %34 : vector<8x8xf32>
    %c32 = arith.constant 32 : index
    %c0_24 = arith.constant 0 : index
    %36 = vector.load %arg6[%c32, %c0_24] : memref<64x8xbf16, #tpu.memory_space<vmem>>, vector<32x8xbf16>
    %37 = arith.truncf %29 : vector<8x32xf32> to vector<8x32xbf16>
    %cst_25 = arith.constant dense<0.000000e+00> : vector<8x8xf32>
    %38 = tpu.matmul %37, %36, %cst_25 {dimension_numbers = #tpu.dot_dimension_numbers<[1], [0], [0], [1], [0, 0, 1, 1], [], []>} : vector<8x32xbf16>, vector<32x8xbf16>, vector<8x8xf32> -> vector<8x8xf32>
    %c1_26 = arith.constant 1 : index
    %c0_27 = arith.constant 0 : index
    %39 = vector.load %arg9[%c1_26, %c0_27] : memref<2x8xf32, #tpu.memory_space<vmem>>, vector<1x8xf32>
    %40 = vector.broadcast %39 : vector<1x8xf32> to vector<8x8xf32>
    %41 = arith.addf %38, %40 : vector<8x8xf32>
    %cst_28 = arith.constant 2.000000e+01 : f32
    %42 = vector.broadcast %cst_28 : f32 to vector<8x8xf32>
    %43 = arith.cmpf ogt, %41, %42 : vector<8x8xf32>
    %cst_29 = arith.constant 2.000000e+01 : f32
    %44 = vector.broadcast %cst_29 : f32 to vector<8x8xf32>
    %45 = arith.minimumf %41, %44 : vector<8x8xf32>
    %46 = math.exp %45 : vector<8x8xf32>
    %47 = math.log1p %46 : vector<8x8xf32>
    %48 = arith.select %43, %41, %47 : vector<8x8xi1>, vector<8x8xf32>
    %cst_30 = arith.constant 1.000000e-07 : f32
    %49 = vector.broadcast %cst_30 : f32 to vector<8x8xf32>
    %50 = arith.maximumf %48, %49 : vector<8x8xf32>
    %cst_31 = arith.constant 1.000000e+00 : f32
    %51 = vector.broadcast %cst_31 : f32 to vector<8x8xf32>
    %52 = arith.divf %51, %50 : vector<8x8xf32>
    %cst_32 = arith.constant dense<0.000000e+00> : vector<8xf32>
    %53 = vector.multi_reduction <add>, %52, %cst_32 [0] : vector<8x8xf32> to vector<8xf32>
    %54 = vector.shape_cast %53 : vector<8xf32> to vector<1x8xf32>
    %cst_33 = arith.constant 1.000000e+00 : f32
    %55 = vector.broadcast %cst_33 : f32 to vector<1x8xf32>
    %56 = arith.divf %55, %54 : vector<1x8xf32>
    %57 = arith.mulf %35, %52 : vector<8x8xf32>
    %cst_34 = arith.constant dense<0.000000e+00> : vector<8xf32>
    %58 = vector.multi_reduction <add>, %57, %cst_34 [0] : vector<8x8xf32> to vector<8xf32>
    %59 = vector.shape_cast %58 : vector<8xf32> to vector<1x8xf32>
    %60 = arith.mulf %56, %59 : vector<1x8xf32>
    %61 = math.sqrt %56 : vector<1x8xf32>
    %c0_35 = arith.constant 0 : index
    %c0_36 = arith.constant 0 : index
    %c0_37 = arith.constant 0 : index
    %62 = vector.load %arg3[%c0_35, %c0_36, %c0_37] : memref<1x1x8xf32, #tpu.memory_space<vmem>>, vector<1x1x8xf32>
    %63 = vector.shape_cast %62 : vector<1x1x8xf32> to vector<1x8xf32>
    %64 = arith.mulf %61, %63 : vector<1x8xf32>
    %65 = arith.addf %60, %64 : vector<1x8xf32>
    %66 = tpu.concatenate %60, %56, %65 in 1 : vector<1x8xf32>, vector<1x8xf32>, vector<1x8xf32> -> vector<1x24xf32>
    %c0_38 = arith.constant 0 : index
    %c0_39 = arith.constant 0 : index
    %c0_40 = arith.constant 0 : index
    %67 = vector.load %arg11[%c0_38, %c0_39, %c0_40] : memref<1x1x24xf32, #tpu.memory_space<vmem>>, vector<1x1x24xf32>
    %68 = vector.shape_cast %67 : vector<1x1x24xf32> to vector<1x24xf32>
    %69 = vector.shape_cast %66 : vector<1x24xf32> to vector<1x1x24xf32>
    tpu.vector_store %arg11[%c0_38, %c0_39, %c0_40], %69 {strides = array<i32>} : memref<1x1x24xf32, #tpu.memory_space<vmem>>, vector<1x1x24xf32>,
    %c0_41 = arith.constant 0 : index
    %c0_42 = arith.constant 0 : index
    %c0_43 = arith.constant 0 : index
    %70 = vector.load %arg2[%c0_41, %c0_42, %c0_43] : memref<1x8x16xf32, #tpu.memory_space<vmem>>, vector<1x8x16xf32>
    %71 = vector.shape_cast %70 : vector<1x8x16xf32> to vector<8x16xf32>
    %72 = arith.truncf %71 : vector<8x16xf32> to vector<8x16xbf16>
    %cst_44 = arith.constant dense<0.000000e+00> : vector<8x32xf32>
    %73 = tpu.matmul %72, %3, %cst_44 {dimension_numbers = #tpu.dot_dimension_numbers<[1], [0], [0], [1], [0, 0, 1, 1], [], []>} : vector<8x16xbf16>, vector<16x32xbf16>, vector<8x32xf32> -> vector<8x32xf32>
    %74 = arith.truncf %65 : vector<1x8xf32> to vector<1x8xbf16>
    %cst_45 = arith.constant dense<0.000000e+00> : vector<1x32xf32>
    %75 = tpu.matmul %74, %4, %cst_45 {dimension_numbers = #tpu.dot_dimension_numbers<[1], [0], [0], [1], [0, 0, 1, 1], [], []>} : vector<1x8xbf16>, vector<8x32xbf16>, vector<1x32xf32> -> vector<1x32xf32>
    %76 = vector.broadcast %75 : vector<1x32xf32> to vector<8x32xf32>
    %77 = arith.addf %73, %76 : vector<8x32xf32>
    %c3 = arith.constant 3 : index
    %c0_46 = arith.constant 0 : index
    %78 = vector.load %arg8[%c3, %c0_46] : memref<6x32xf32, #tpu.memory_space<vmem>>, vector<1x32xf32>
    %79 = vector.broadcast %78 : vector<1x32xf32> to vector<8x32xf32>
    %80 = arith.addf %77, %79 : vector<8x32xf32>
    %cst_47 = arith.constant 0.000000e+00 : f32
    %81 = vector.broadcast %cst_47 : f32 to vector<8x32xf32>
    %82 = arith.maximumf %80, %81 : vector<8x32xf32>
    %83 = arith.truncf %82 : vector<8x32xf32> to vector<8x32xbf16>
    %cst_48 = arith.constant dense<0.000000e+00> : vector<8x32xf32>
    %84 = tpu.matmul %83, %5, %cst_48 {dimension_numbers = #tpu.dot_dimension_numbers<[1], [0], [0], [1], [0, 0, 1, 1], [], []>} : vector<8x32xbf16>, vector<32x32xbf16>, vector<8x32xf32> -> vector<8x32xf32>
    %c4 = arith.constant 4 : index
    %c0_49 = arith.constant 0 : index
    %85 = vector.load %arg8[%c4, %c0_49] : memref<6x32xf32, #tpu.memory_space<vmem>>, vector<1x32xf32>
    %86 = vector.broadcast %85 : vector<1x32xf32> to vector<8x32xf32>
    %87 = arith.addf %84, %86 : vector<8x32xf32>
    %cst_50 = arith.constant 0.000000e+00 : f32
    %88 = vector.broadcast %cst_50 : f32 to vector<8x32xf32>
    %89 = arith.maximumf %87, %88 : vector<8x32xf32>
    %90 = arith.truncf %89 : vector<8x32xf32> to vector<8x32xbf16>
    %cst_51 = arith.constant dense<0.000000e+00> : vector<8x32xf32>
    %91 = tpu.matmul %90, %6, %cst_51 {dimension_numbers = #tpu.dot_dimension_numbers<[1], [0], [0], [1], [0, 0, 1, 1], [], []>} : vector<8x32xbf16>, vector<32x32xbf16>, vector<8x32xf32> -> vector<8x32xf32>
    %c5 = arith.constant 5 : index
    %c0_52 = arith.constant 0 : index
    %92 = vector.load %arg8[%c5, %c0_52] : memref<6x32xf32, #tpu.memory_space<vmem>>, vector<1x32xf32>
    %93 = vector.broadcast %92 : vector<1x32xf32> to vector<8x32xf32>
    %94 = arith.addf %91, %93 : vector<8x32xf32>
    %cst_53 = arith.constant 0.000000e+00 : f32
    %95 = vector.broadcast %cst_53 : f32 to vector<8x32xf32>
    %96 = arith.maximumf %94, %95 : vector<8x32xf32>
    %c0_54 = arith.constant 0 : index
    %c0_55 = arith.constant 0 : index
    %97 = vector.load %arg7[%c0_54, %c0_55] : memref<64x4xbf16, #tpu.memory_space<vmem>>, vector<32x4xbf16>
    %98 = arith.truncf %96 : vector<8x32xf32> to vector<8x32xbf16>
    %cst_56 = arith.constant dense<0.000000e+00> : vector<8x4xf32>
    %99 = tpu.matmul %98, %97, %cst_56 {dimension_numbers = #tpu.dot_dimension_numbers<[1], [0], [0], [1], [0, 0, 1, 1], [], []>} : vector<8x32xbf16>, vector<32x4xbf16>, vector<8x4xf32> -> vector<8x4xf32>
    %c0_57 = arith.constant 0 : index
    %c0_58 = arith.constant 0 : index
    %100 = vector.load %arg10[%c0_57, %c0_58] : memref<2x4xf32, #tpu.memory_space<vmem>>, vector<1x4xf32>
    %101 = vector.broadcast %100 : vector<1x4xf32> to vector<8x4xf32>
    %102 = arith.addf %99, %101 : vector<8x4xf32>
    %c32_59 = arith.constant 32 : index
    %c0_60 = arith.constant 0 : index
    %103 = vector.load %arg7[%c32_59, %c0_60] : memref<64x4xbf16, #tpu.memory_space<vmem>>, vector<32x4xbf16>
    %104 = arith.truncf %96 : vector<8x32xf32> to vector<8x32xbf16>
    %cst_61 = arith.constant dense<0.000000e+00> : vector<8x4xf32>
    %105 = tpu.matmul %104, %103, %cst_61 {dimension_numbers = #tpu.dot_dimension_numbers<[1], [0], [0], [1], [0, 0, 1, 1], [], []>} : vector<8x32xbf16>, vector<32x4xbf16>, vector<8x4xf32> -> vector<8x4xf32>
    %c1_62 = arith.constant 1 : index
    %c0_63 = arith.constant 0 : index
    %106 = vector.load %arg10[%c1_62, %c0_63] : memref<2x4xf32, #tpu.memory_space<vmem>>, vector<1x4xf32>
    %107 = vector.broadcast %106 : vector<1x4xf32> to vector<8x4xf32>
    %108 = arith.addf %105, %107 : vector<8x4xf32>
    %cst_64 = arith.constant -2.000000e+01 : f32
    %cst_65 = arith.constant 2.000000e+00 : f32
    %109 = vector.broadcast %cst_64 : f32 to vector<8x4xf32>
    %110 = arith.maximumf %109, %108 : vector<8x4xf32>
    %111 = vector.broadcast %cst_65 : f32 to vector<8x4xf32>
    %112 = arith.minimumf %111, %110 : vector<8x4xf32>
    %113 = math.exp %112 : vector<8x4xf32>
    %c0_66 = arith.constant 0 : index
    %c0_67 = arith.constant 0 : index
    %c0_68 = arith.constant 0 : index
    %114 = vector.load %arg4[%c0_66, %c0_67, %c0_68] : memref<1x8x4xf32, #tpu.memory_space<vmem>>, vector<1x8x4xf32>
    %115 = vector.shape_cast %114 : vector<1x8x4xf32> to vector<8x4xf32>
    %116 = arith.mulf %113, %115 : vector<8x4xf32>
    %117 = arith.addf %102, %116 : vector<8x4xf32>
    %118 = math.tanh %117 : vector<8x4xf32>
    %cst_69 = arith.constant -5.000000e-01 : f32
    %119 = vector.broadcast %cst_69 : f32 to vector<8x4xf32>
    %120 = arith.mulf %119, %115 : vector<8x4xf32>
    %121 = arith.mulf %120, %115 : vector<8x4xf32>
    %122 = arith.subf %121, %112 : vector<8x4xf32>
    %cst_70 = arith.constant 0.918938517 : f32
    %123 = vector.broadcast %cst_70 : f32 to vector<8x4xf32>
    %124 = arith.subf %122, %123 : vector<8x4xf32>
    %125 = arith.mulf %118, %118 : vector<8x4xf32>
    %cst_71 = arith.constant 1.000000e+00 : f32
    %126 = vector.broadcast %cst_71 : f32 to vector<8x4xf32>
    %127 = arith.subf %126, %125 : vector<8x4xf32>
    %cst_72 = arith.constant 9.99999997E-7 : f32
    %128 = vector.broadcast %cst_72 : f32 to vector<8x4xf32>
    %129 = arith.addf %127, %128 : vector<8x4xf32>
    %130 = math.log %129 : vector<8x4xf32>
    %131 = arith.subf %124, %130 : vector<8x4xf32>
    %cst_73 = arith.constant dense<0.000000e+00> : vector<8xf32>
    %132 = vector.multi_reduction <add>, %131, %cst_73 [1] : vector<8x4xf32> to vector<8xf32>
    %133 = vector.shape_cast %132 : vector<8xf32> to vector<8x1xf32>
    %134 = tpu.concatenate %118, %102, %112, %113, %117, %133 in 1 : vector<8x4xf32>, vector<8x4xf32>, vector<8x4xf32>, vector<8x4xf32>, vector<8x4xf32>, vector<8x1xf32> -> vector<8x21xf32>
    %c0_74 = arith.constant 0 : index
    %c0_75 = arith.constant 0 : index
    %c0_76 = arith.constant 0 : index
    %135 = vector.load %arg12[%c0_74, %c0_75, %c0_76] : memref<1x8x21xf32, #tpu.memory_space<vmem>>, vector<1x8x21xf32>
    %136 = vector.shape_cast %135 : vector<1x8x21xf32> to vector<8x21xf32>
    %137 = vector.shape_cast %134 : vector<8x21xf32> to vector<1x8x21xf32>
    tpu.vector_store %arg12[%c0_74, %c0_75, %c0_76], %137 {strides = array<i32>} : memref<1x8x21xf32, #tpu.memory_space<vmem>>, vector<1x8x21xf32>,
    return
  }
  func.func @transform_0(%arg0: i32) -> (i32, i32, i32) {
    %c0_i32 = arith.constant 0 : i32
    %c0_i32_0 = arith.constant 0 : i32
    %c0_i32_1 = arith.constant 0 : i32
    return %arg0, %c0_i32, %c0_i32_0 : i32, i32, i32
  }
  func.func @transform_1(%arg0: i32) -> (i32, i32, i32) {
    %c0_i32 = arith.constant 0 : i32
    %c0_i32_0 = arith.constant 0 : i32
    %c0_i32_1 = arith.constant 0 : i32
    return %arg0, %c0_i32, %c0_i32_0 : i32, i32, i32
  }
  func.func @transform_2(%arg0: i32) -> (i32, i32, i32) {
    %c0_i32 = arith.constant 0 : i32
    %c0_i32_0 = arith.constant 0 : i32
    %c0_i32_1 = arith.constant 0 : i32
    return %arg0, %c0_i32, %c0_i32_0 : i32, i32, i32
  }
  func.func @transform_3(%arg0: i32) -> (i32, i32, i32) {
    %c0_i32 = arith.constant 0 : i32
    %c0_i32_0 = arith.constant 0 : i32
    %c0_i32_1 = arith.constant 0 : i32
    return %arg0, %c0_i32, %c0_i32_0 : i32, i32, i32
  }
  func.func @transform_4(%arg0: i32) -> (i32, i32) {
    %c0_i32 = arith.constant 0 : i32
    %c0_i32_0 = arith.constant 0 : i32
    %c0_i32_1 = arith.constant 0 : i32
    return %c0_i32, %c0_i32_0 : i32, i32
  }
  func.func @transform_5(%arg0: i32) -> (i32, i32) {
    %c0_i32 = arith.constant 0 : i32
    %c0_i32_0 = arith.constant 0 : i32
    %c0_i32_1 = arith.constant 0 : i32
    return %c0_i32, %c0_i32_0 : i32, i32
  }
  func.func @transform_6(%arg0: i32) -> (i32, i32) {
    %c0_i32 = arith.constant 0 : i32
    %c0_i32_0 = arith.constant 0 : i32
    %c0_i32_1 = arith.constant 0 : i32
    return %c0_i32, %c0_i32_0 : i32, i32
  }
  func.func @transform_7(%arg0: i32) -> (i32, i32) {
    %c0_i32 = arith.constant 0 : i32
    %c0_i32_0 = arith.constant 0 : i32
    %c0_i32_1 = arith.constant 0 : i32
    return %c0_i32, %c0_i32_0 : i32, i32
  }
  func.func @transform_8(%arg0: i32) -> (i32, i32) {
    %c0_i32 = arith.constant 0 : i32
    %c0_i32_0 = arith.constant 0 : i32
    %c0_i32_1 = arith.constant 0 : i32
    return %c0_i32, %c0_i32_0 : i32, i32
  }
  func.func @transform_9(%arg0: i32) -> (i32, i32) {
    %c0_i32 = arith.constant 0 : i32
    %c0_i32_0 = arith.constant 0 : i32
    %c0_i32_1 = arith.constant 0 : i32
    return %c0_i32, %c0_i32_0 : i32, i32
  }
  func.func @transform_10(%arg0: i32) -> (i32, i32, i32) {
    %c0_i32 = arith.constant 0 : i32
    %c0_i32_0 = arith.constant 0 : i32
    %c0_i32_1 = arith.constant 0 : i32
    return %arg0, %c0_i32, %c0_i32_0 : i32, i32, i32
  }
  func.func @transform_11(%arg0: i32) -> (i32, i32, i32) {
    %c0_i32 = arith.constant 0 : i32
    %c0_i32_0 = arith.constant 0 : i32
    %c0_i32_1 = arith.constant 0 : i32
    return %arg0, %c0_i32, %c0_i32_0 : i32, i32, i32
  }
}

</mosaic_0001>

<llo_original>
// kernel: pearl_agent_forward.1
$region0: #{pearl_agent_forward.1}
  #allocation0 [shape = 'u32[]', space=smem, size = 0x4, offset = 0x4, fixed_abs, tag = 'smem constant byte address 0x4 - core index']
  #allocation1 [shape = 'u32[144,128]{1,0:T(1,128)}', space=vmem, size = 0x12000, scoped, tag = 'internal scratch']
  %s0 = inlined_call_operand.vmem [shape: f32[2,8,21], index: 0, kind: input, shape index: {}]
  %s1 = inlined_call_operand.vmem [shape: f32[2,8,16], index: 1, kind: input, shape index: {}]
  %s2 = inlined_call_operand.vmem [shape: f32[2,1,8], index: 2, kind: input, shape index: {}]
  %s3 = inlined_call_operand.vmem [shape: f32[2,8,4], index: 3, kind: input, shape index: {}]
  %s4 = inlined_call_operand.vmem [shape: bf16[176,32], index: 4, kind: input, shape index: {}]
  %s5 = inlined_call_operand.vmem [shape: bf16[64,8], index: 5, kind: input, shape index: {}]
  %s6 = inlined_call_operand.vmem [shape: bf16[64,4], index: 6, kind: input, shape index: {}]
  %s7 = inlined_call_operand.vmem [shape: f32[6,32], index: 7, kind: input, shape index: {}]
  %s8 = inlined_call_operand.vmem [shape: f32[2,8], index: 8, kind: input, shape index: {}]
  %s9 = inlined_call_operand.vmem [shape: f32[2,4], index: 9, kind: input, shape index: {}]
  %s10 = inlined_call_operand.vmem [shape: f32[2,1,24], index: 10, kind: output, shape index: {0}]
  %s11 = inlined_call_operand.vmem [shape: f32[2,8,21], index: 11, kind: output, shape index: {1}]
  %12 = xla_tuple %s10, %s11
  %s13 = sld [smem:[#allocation0]]
  $region81: #{pearl_agent_forward.1} parent=0
    _
  %s15 = ssub.s32 1, %s13
  %s16 = scalar_select 0, %s15, %s13
  loop: start=0, step=1, limit=4
  $region2: #{pearl_agent_forward.1} parent=0 // loop_pre_header
    _
  $region3: #{pearl_agent_forward.1} parent=0 // loop_header
    %s18 = sphi 0, %s22
    %p19 = scmp.ge.s32.totalorder %s18, 4
    %s28 = sphi 0, %s30
    %s31 = sphi 0, %s28
    %s32 = sphi 0, %s31
    %s48 = sphi 0, %s32
    %s54 = sphi 0, %s56
    %s57 = sphi 0, %s54
    %s58 = sphi 0, %s57
    %s74 = sphi 0, %s58
    %s80 = sphi 0, %s82
    %s83 = sphi 0, %s80
    %s84 = sphi 0, %s83
    %s100 = sphi 0, %s84
    %s106 = sphi 0, %s108
    %s109 = sphi 0, %s106
    %s110 = sphi 0, %s109
    %s126 = sphi 0, %s110
    %s130 = sphi 0, %s130
    %s132 = sphi 0, %s130
    %s133 = sphi 0, %s132
    %s147 = sphi 0, %s133
    %s151 = sphi 0, %s151
    %s153 = sphi 0, %s151
    %s154 = sphi 0, %s153
    %s168 = sphi 0, %s154
    %s172 = sphi 0, %s172
    %s174 = sphi 0, %s172
    %s175 = sphi 0, %s174
    %s189 = sphi 0, %s175
    %s193 = sphi 0, %s193
    %s195 = sphi 0, %s193
    %s196 = sphi 0, %s195
    %s210 = sphi 0, %s196
    %s214 = sphi 0, %s214
    %s216 = sphi 0, %s214
    %s217 = sphi 0, %s216
    %s231 = sphi 0, %s217
    %s235 = sphi 0, %s235
    %s237 = sphi 0, %s235
    %s238 = sphi 0, %s237
    %s252 = sphi 0, %s238
    %s258 = sphi 0, %s260
    %s261 = sphi 0, %s258
    %s262 = sphi 0, %s261
    %s278 = sphi 0, %s262
    %s284 = sphi 0, %s286
    %s287 = sphi 0, %s284
    %s288 = sphi 0, %s287
    %s304 = sphi 0, %s288
  $region4: #{pearl_agent_forward.1} parent=0 // loop_header_branch
    %21 = sbr.rel (%p19) target = $region8
  $region5: #{pearl_agent_forward.1} parent=0 // loop_body
    %s23 = ssub.s32 %s18, 1
    %s24 = ssub.s32 %s18, 2
    %s25 = sadd.s32 %s18, 1
    %s26 = ssub.s32 %s18, %s25
    %p27 = scmp.eq.s32.totalorder %s26, 0
    %s29 = sadd.s32 %s28, 1
    %s30 = scalar_select %p27, %s28, %s29
    %p33 = pneg %p27
    %p34 = scmp.eq.s32.totalorder %s18, 1
    %p35 = por %p33, %p34
    %p36 = scmp.ne.s32.totalorder %s28, %s31
    %p37 = scmp.eq.s32.totalorder %s18, 0
    %p38 = por %p36, %p37
    %p39 = scmp.ne.s32.totalorder %s28, %s31
    %p40 = scmp.eq.s32.totalorder %s23, 1
    %p41 = por %p39, %p40
    %p42 = scmp.ne.s32.totalorder %s31, %s32
    %p43 = scmp.eq.s32.totalorder %s23, 0
    %p44 = por %p42, %p43
    %p45 = scmp.ne.s32.totalorder %s31, %s32
    %p46 = scmp.eq.s32.totalorder %s24, 1
    %p47 = por %p45, %p46
    %p49 = scmp.ne.s32.totalorder %s32, %s48
    %p50 = scmp.eq.s32.totalorder %s24, 0
    %p51 = por %p49, %p50
    %s52 = ssub.s32 %s18, %s25
    %p53 = scmp.eq.s32.totalorder %s52, 0
    %s55 = sadd.s32 %s54, 1
    %s56 = scalar_select %p53, %s54, %s55
    %p59 = pneg %p53
    %p60 = scmp.eq.s32.totalorder %s18, 1
    %p61 = por %p59, %p60
    %p62 = scmp.ne.s32.totalorder %s54, %s57
    %p63 = scmp.eq.s32.totalorder %s18, 0
    %p64 = por %p62, %p63
    %p65 = scmp.ne.s32.totalorder %s54, %s57
    %p66 = scmp.eq.s32.totalorder %s23, 1
    %p67 = por %p65, %p66
    %p68 = scmp.ne.s32.totalorder %s57, %s58
    %p69 = scmp.eq.s32.totalorder %s23, 0
    %p70 = por %p68, %p69
    %p71 = scmp.ne.s32.totalorder %s57, %s58
    %p72 = scmp.eq.s32.totalorder %s24, 1
    %p73 = por %p71, %p72
    %p75 = scmp.ne.s32.totalorder %s58, %s74
    %p76 = scmp.eq.s32.totalorder %s24, 0
    %p77 = por %p75, %p76
    %s78 = ssub.s32 %s18, %s25
    %p79 = scmp.eq.s32.totalorder %s78, 0
    %s81 = sadd.s32 %s80, 1
    %s82 = scalar_select %p79, %s80, %s81
    %p85 = pneg %p79
    %p86 = scmp.eq.s32.totalorder %s18, 1
    %p87 = por %p85, %p86
    %p88 = scmp.ne.s32.totalorder %s80, %s83
    %p89 = scmp.eq.s32.totalorder %s18, 0
    %p90 = por %p88, %p89
    %p91 = scmp.ne.s32.totalorder %s80, %s83
    %p92 = scmp.eq.s32.totalorder %s23, 1
    %p93 = por %p91, %p92
    %p94 = scmp.ne.s32.totalorder %s83, %s84
    %p95 = scmp.eq.s32.totalorder %s23, 0
    %p96 = por %p94, %p95
    %p97 = scmp.ne.s32.totalorder %s83, %s84
    %p98 = scmp.eq.s32.totalorder %s24, 1
    %p99 = por %p97, %p98
    %p101 = scmp.ne.s32.totalorder %s84, %s100
    %p102 = scmp.eq.s32.totalorder %s24, 0
    %p103 = por %p101, %p102
    %s104 = ssub.s32 %s18, %s25
    %p105 = scmp.eq.s32.totalorder %s104, 0
    %s107 = sadd.s32 %s106, 1
    %s108 = scalar_select %p105, %s106, %s107
    %p111 = pneg %p105
    %p112 = scmp.eq.s32.totalorder %s18, 1
    %p113 = por %p111, %p112
    %p114 = scmp.ne.s32.totalorder %s106, %s109
    %p115 = scmp.eq.s32.totalorder %s18, 0
    %p116 = por %p114, %p115
    %p117 = scmp.ne.s32.totalorder %s106, %s109
    %p118 = scmp.eq.s32.totalorder %s23, 1
    %p119 = por %p117, %p118
    %p120 = scmp.ne.s32.totalorder %s109, %s110
    %p121 = scmp.eq.s32.totalorder %s23, 0
    %p122 = por %p120, %p121
    %p123 = scmp.ne.s32.totalorder %s109, %s110
    %p124 = scmp.eq.s32.totalorder %s24, 1
    %p125 = por %p123, %p124
    %p127 = scmp.ne.s32.totalorder %s110, %s126
    %p128 = scmp.eq.s32.totalorder %s24, 0
    %p129 = por %p127, %p128
    %s131 = sadd.s32 %s130, 1
    %p134 = scmp.eq.s32.totalorder %s18, 1
    %p135 = scmp.ne.s32.totalorder %s130, %s132
    %p136 = scmp.eq.s32.totalorder %s18, 0
    %p137 = por %p135, %p136
    %p138 = scmp.ne.s32.totalorder %s130, %s132
    %p139 = scmp.eq.s32.totalorder %s23, 1
    %p140 = por %p138, %p139
    %p141 = scmp.ne.s32.totalorder %s132, %s133
    %p142 = scmp.eq.s32.totalorder %s23, 0
    %p143 = por %p141, %p142
    %p144 = scmp.ne.s32.totalorder %s132, %s133
    %p145 = scmp.eq.s32.totalorder %s24, 1
    %p146 = por %p144, %p145
    %p148 = scmp.ne.s32.totalorder %s133, %s147
    %p149 = scmp.eq.s32.totalorder %s24, 0
    %p150 = por %p148, %p149
    %s152 = sadd.s32 %s151, 1
    %p155 = scmp.eq.s32.totalorder %s18, 1
    %p156 = scmp.ne.s32.totalorder %s151, %s153
    %p157 = scmp.eq.s32.totalorder %s18, 0
    %p158 = por %p156, %p157
    %p159 = scmp.ne.s32.totalorder %s151, %s153
    %p160 = scmp.eq.s32.totalorder %s23, 1
    %p161 = por %p159, %p160
    %p162 = scmp.ne.s32.totalorder %s153, %s154
    %p163 = scmp.eq.s32.totalorder %s23, 0
    %p164 = por %p162, %p163
    %p165 = scmp.ne.s32.totalorder %s153, %s154
    %p166 = scmp.eq.s32.totalorder %s24, 1
    %p167 = por %p165, %p166
    %p169 = scmp.ne.s32.totalorder %s154, %s168
    %p170 = scmp.eq.s32.totalorder %s24, 0
    %p171 = por %p169, %p170
    %s173 = sadd.s32 %s172, 1
    %p176 = scmp.eq.s32.totalorder %s18, 1
    %p177 = scmp.ne.s32.totalorder %s172, %s174
    %p178 = scmp.eq.s32.totalorder %s18, 0
    %p179 = por %p177, %p178
    %p180 = scmp.ne.s32.totalorder %s172, %s174
    %p181 = scmp.eq.s32.totalorder %s23, 1
    %p182 = por %p180, %p181
    %p183 = scmp.ne.s32.totalorder %s174, %s175
    %p184 = scmp.eq.s32.totalorder %s23, 0
    %p185 = por %p183, %p184
    %p186 = scmp.ne.s32.totalorder %s174, %s175
    %p187 = scmp.eq.s32.totalorder %s24, 1
    %p188 = por %p186, %p187
    %p190 = scmp.ne.s32.totalorder %s175, %s189
    %p191 = scmp.eq.s32.totalorder %s24, 0
    %p192 = por %p190, %p191
    %s194 = sadd.s32 %s193, 1
    %p197 = scmp.eq.s32.totalorder %s18, 1
    %p198 = scmp.ne.s32.totalorder %s193, %s195
    %p199 = scmp.eq.s32.totalorder %s18, 0
    %p200 = por %p198, %p199
    %p201 = scmp.ne.s32.totalorder %s193, %s195
    %p202 = scmp.eq.s32.totalorder %s23, 1
    %p203 = por %p201, %p202
    %p204 = scmp.ne.s32.totalorder %s195, %s196
    %p205 = scmp.eq.s32.totalorder %s23, 0
    %p206 = por %p204, %p205
    %p207 = scmp.ne.s32.totalorder %s195, %s196
    %p208 = scmp.eq.s32.totalorder %s24, 1
    %p209 = por %p207, %p208
    %p211 = scmp.ne.s32.totalorder %s196, %s210
    %p212 = scmp.eq.s32.totalorder %s24, 0
    %p213 = por %p211, %p212
    %s215 = sadd.s32 %s214, 1
    %p218 = scmp.eq.s32.totalorder %s18, 1
    %p219 = scmp.ne.s32.totalorder %s214, %s216
    %p220 = scmp.eq.s32.totalorder %s18, 0
    %p221 = por %p219, %p220
    %p222 = scmp.ne.s32.totalorder %s214, %s216
    %p223 = scmp.eq.s32.totalorder %s23, 1
    %p224 = por %p222, %p223
    %p225 = scmp.ne.s32.totalorder %s216, %s217
    %p226 = scmp.eq.s32.totalorder %s23, 0
    %p227 = por %p225, %p226
    %p228 = scmp.ne.s32.totalorder %s216, %s217
    %p229 = scmp.eq.s32.totalorder %s24, 1
    %p230 = por %p228, %p229
    %p232 = scmp.ne.s32.totalorder %s217, %s231
    %p233 = scmp.eq.s32.totalorder %s24, 0
    %p234 = por %p232, %p233
    %s236 = sadd.s32 %s235, 1
    %p239 = scmp.eq.s32.totalorder %s18, 1
    %p240 = scmp.ne.s32.totalorder %s235, %s237
    %p241 = scmp.eq.s32.totalorder %s18, 0
    %p242 = por %p240, %p241
    %p243 = scmp.ne.s32.totalorder %s235, %s237
    %p244 = scmp.eq.s32.totalorder %s23, 1
    %p245 = por %p243, %p244
    %p246 = scmp.ne.s32.totalorder %s237, %s238
    %p247 = scmp.eq.s32.totalorder %s23, 0
    %p248 = por %p246, %p247
    %p249 = scmp.ne.s32.totalorder %s237, %s238
    %p250 = scmp.eq.s32.totalorder %s24, 1
    %p251 = por %p249, %p250
    %p253 = scmp.ne.s32.totalorder %s238, %s252
    %p254 = scmp.eq.s32.totalorder %s24, 0
    %p255 = por %p253, %p254
    %s256 = ssub.s32 %s18, %s25
    %p257 = scmp.eq.s32.totalorder %s256, 0
    %s259 = sadd.s32 %s258, 1
    %s260 = scalar_select %p257, %s258, %s259
    %p263 = pneg %p257
    %p264 = scmp.eq.s32.totalorder %s18, 1
    %p265 = por %p263, %p264
    %p266 = scmp.ne.s32.totalorder %s258, %s261
    %p267 = scmp.eq.s32.totalorder %s18, 0
    %p268 = por %p266, %p267
    %p269 = scmp.ne.s32.totalorder %s258, %s261
    %p270 = scmp.eq.s32.totalorder %s23, 1
    %p271 = por %p269, %p270
    %p272 = scmp.ne.s32.totalorder %s261, %s262
    %p273 = scmp.eq.s32.totalorder %s23, 0
    %p274 = por %p272, %p273
    %p275 = scmp.ne.s32.totalorder %s261, %s262
    %p276 = scmp.eq.s32.totalorder %s24, 1
    %p277 = por %p275, %p276
    %p279 = scmp.ne.s32.totalorder %s262, %s278
    %p280 = scmp.eq.s32.totalorder %s24, 0
    %p281 = por %p279, %p280
    %s282 = ssub.s32 %s18, %s25
    %p283 = scmp.eq.s32.totalorder %s282, 0
    %s285 = sadd.s32 %s284, 1
    %s286 = scalar_select %p283, %s284, %s285
    %p289 = pneg %p283
    %p290 = scmp.eq.s32.totalorder %s18, 1
    %p291 = por %p289, %p290
    %p292 = scmp.ne.s32.totalorder %s284, %s287
    %p293 = scmp.eq.s32.totalorder %s18, 0
    %p294 = por %p292, %p293
    %p295 = scmp.ne.s32.totalorder %s284, %s287
    %p296 = scmp.eq.s32.totalorder %s23, 1
    %p297 = por %p295, %p296
    %p298 = scmp.ne.s32.totalorder %s287, %s288
    %p299 = scmp.eq.s32.totalorder %s23, 0
    %p300 = por %p298, %p299
    %p301 = scmp.ne.s32.totalorder %s287, %s288
    %p302 = scmp.eq.s32.totalorder %s24, 1
    %p303 = por %p301, %p302
    %p305 = scmp.ne.s32.totalorder %s288, %s304
    %p306 = scmp.eq.s32.totalorder %s24, 0
    %p307 = por %p305, %p306
    %p308 = scmp.le.s32.totalorder 1, %s18
    %p309 = scmp.lt.s32.totalorder %s18, 3
    %p310 = pnand %p308, %p309
    %p311 = pneg %p310
    // Predicated region
    $region9: #{pearl_agent_forward.1} parent=5 // pred_check
      _
    $region10: #{pearl_agent_forward.1} parent=5 // pred_check_branch
      %313 = sbr.rel (%p310) target = $region12
    $region11: #{pearl_agent_forward.1} parent=5 // pred_region
      %s314 = ssub.s32 %s18, 1
      // Predicated region
      $region13: #{pearl_agent_forward.1} parent=11 // pred_check
        %p315 = pneg %p143
      $region14: #{pearl_agent_forward.1} parent=11 // pred_check_branch
        %317 = sbr.rel (%p315) target = $region16
      $region15: #{pearl_agent_forward.1} parent=11 // pred_region
        _
      $region16: #{pearl_agent_forward.1} parent=11 // pred_fallthru
        _
      // Predicated region
      $region17: #{pearl_agent_forward.1} parent=11 // pred_check
        %p318 = pneg %p164
      $region18: #{pearl_agent_forward.1} parent=11 // pred_check_branch
        %320 = sbr.rel (%p318) target = $region20
      $region19: #{pearl_agent_forward.1} parent=11 // pred_region
        _
      $region20: #{pearl_agent_forward.1} parent=11 // pred_fallthru
        _
      // Predicated region
      $region21: #{pearl_agent_forward.1} parent=11 // pred_check
        %p321 = pneg %p185
      $region22: #{pearl_agent_forward.1} parent=11 // pred_check_branch
        %323 = sbr.rel (%p321) target = $region24
      $region23: #{pearl_agent_forward.1} parent=11 // pred_region
        _
      $region24: #{pearl_agent_forward.1} parent=11 // pred_fallthru
        _
      // Predicated region
      $region25: #{pearl_agent_forward.1} parent=11 // pred_check
        %p324 = pneg %p206
      $region26: #{pearl_agent_forward.1} parent=11 // pred_check_branch
        %326 = sbr.rel (%p324) target = $region28
      $region27: #{pearl_agent_forward.1} parent=11 // pred_region
        _
      $region28: #{pearl_agent_forward.1} parent=11 // pred_fallthru
        _
      // Predicated region
      $region29: #{pearl_agent_forward.1} parent=11 // pred_check
        %p327 = pneg %p227
      $region30: #{pearl_agent_forward.1} parent=11 // pred_check_branch
        %329 = sbr.rel (%p327) target = $region32
      $region31: #{pearl_agent_forward.1} parent=11 // pred_region
        _
      $region32: #{pearl_agent_forward.1} parent=11 // pred_fallthru
        _
      // Predicated region
      $region33: #{pearl_agent_forward.1} parent=11 // pred_check
        %p330 = pneg %p248
      $region34: #{pearl_agent_forward.1} parent=11 // pred_check_branch
        %332 = sbr.rel (%p330) target = $region36
      $region35: #{pearl_agent_forward.1} parent=11 // pred_region
        _
      $region36: #{pearl_agent_forward.1} parent=11 // pred_fallthru
        _
    $region12: #{pearl_agent_forward.1} parent=5 // pred_fallthru
      _
    %p333 = scmp.lt.s32.totalorder %s18, 2
    // Predicated region
    $region37: #{pearl_agent_forward.1} parent=5 // pred_check
      %p334 = pneg %p333
    $region38: #{pearl_agent_forward.1} parent=5 // pred_check_branch
      %336 = sbr.rel (%p334) target = $region40
    $region39: #{pearl_agent_forward.1} parent=5 // pred_region
      // Predicated region
      $region41: #{pearl_agent_forward.1} parent=39 // pred_check
        %p337 = pneg %p38
      $region42: #{pearl_agent_forward.1} parent=39 // pred_check_branch
        %339 = sbr.rel (%p337) target = $region44
      $region43: #{pearl_agent_forward.1} parent=39 // pred_region
        %p340 = scmp.lt.s32.totalorder %s18, 1
        %s341 = scalar_select %p340, %s18, 1
        %s342 = smul.addr %s341, 8
        %s343 = scalar_lea.vmem %s0, %s342
      $region44: #{pearl_agent_forward.1} parent=39 // pred_fallthru
        _
      // Predicated region
      $region45: #{pearl_agent_forward.1} parent=39 // pred_check
        %p344 = pneg %p64
      $region46: #{pearl_agent_forward.1} parent=39 // pred_check_branch
        %346 = sbr.rel (%p344) target = $region48
      $region47: #{pearl_agent_forward.1} parent=39 // pred_region
        %p347 = scmp.lt.s32.totalorder %s18, 1
        %s348 = scalar_select %p347, %s18, 1
        %s349 = smul.addr %s348, 8
        %s350 = scalar_lea.vmem %s1, %s349
      $region48: #{pearl_agent_forward.1} parent=39 // pred_fallthru
        _
      // Predicated region
      $region49: #{pearl_agent_forward.1} parent=39 // pred_check
        %p351 = pneg %p90
      $region50: #{pearl_agent_forward.1} parent=39 // pred_check_branch
        %353 = sbr.rel (%p351) target = $region52
      $region51: #{pearl_agent_forward.1} parent=39 // pred_region
        %p354 = scmp.lt.s32.totalorder %s18, 1
        %s355 = scalar_select %p354, %s18, 1
        %s356 = scalar_lea.vmem %s2, %s355
      $region52: #{pearl_agent_forward.1} parent=39 // pred_fallthru
        _
      // Predicated region
      $region53: #{pearl_agent_forward.1} parent=39 // pred_check
        %p357 = pneg %p116
      $region54: #{pearl_agent_forward.1} parent=39 // pred_check_branch
        %359 = sbr.rel (%p357) target = $region56
      $region55: #{pearl_agent_forward.1} parent=39 // pred_region
        %p360 = scmp.lt.s32.totalorder %s18, 1
        %s361 = scalar_select %p360, %s18, 1
        %s362 = smul.addr %s361, 8
        %s363 = scalar_lea.vmem %s3, %s362
      $region56: #{pearl_agent_forward.1} parent=39 // pred_fallthru
        _
    $region40: #{pearl_agent_forward.1} parent=5 // pred_fallthru
      _
    %p364 = scmp.le.s32.totalorder 1, %s18
    %p365 = scmp.lt.s32.totalorder %s18, 3
    %p366 = pnand %p364, %p365
    %p367 = pneg %p366
    // Predicated region
    $region57: #{pearl_agent_forward.1} parent=5 // pred_check
      _
    $region58: #{pearl_agent_forward.1} parent=5 // pred_check_branch
      %369 = sbr.rel (%p366) target = $region60
    $region59: #{pearl_agent_forward.1} parent=5 // pred_region
      %s370 = ssub.s32 %s18, 1
      %p371 = scmp.lt.s32.totalorder %s23, 1
      %s372 = scalar_select %p371, %s23, 1
      %s373 = smul.addr %s372, 8
      %s374 = scalar_lea.vmem %s0, %s373
      %p375 = pneg %p44
      %p376 = pneg %p41
      %p377 = scmp.lt.s32.totalorder %s23, 1
      %s378 = scalar_select %p377, %s23, 1
      %s379 = smul.addr %s378, 8
      %s380 = scalar_lea.vmem %s1, %s379
      %p381 = pneg %p70
      %p382 = pneg %p67
      %p383 = scmp.lt.s32.totalorder %s23, 1
      %s384 = scalar_select %p383, %s23, 1
      %s385 = scalar_lea.vmem %s2, %s384
      %p386 = pneg %p96
      %p387 = pneg %p93
      %p388 = scmp.lt.s32.totalorder %s23, 1
      %s389 = scalar_select %p388, %s23, 1
      %s390 = smul.addr %s389, 8
      %s391 = scalar_lea.vmem %s3, %s390
      %p392 = pneg %p122
      %p393 = pneg %p119
      %p394 = pneg %p143
      %p395 = pneg %p140
      %p396 = pneg %p164
      %p397 = pneg %p161
      %p398 = pneg %p185
      %p399 = pneg %p182
      %p400 = pneg %p206
      %p401 = pneg %p203
      %p402 = pneg %p227
      %p403 = pneg %p224
      %p404 = pneg %p248
      %p405 = pneg %p245
      %p406 = pneg %p274
      %p407 = pneg %p271
      %p408 = scmp.lt.s32.totalorder %s23, 1
      %s409 = scalar_select %p408, %s23, 1
      %s410 = scalar_lea.vmem %s10, %s409
      %p411 = pneg %p300
      %p412 = pneg %p297
      %p413 = scmp.lt.s32.totalorder %s23, 1
      %s414 = scalar_select %p413, %s23, 1
      %s415 = smul.addr %s414, 8
      %s416 = scalar_lea.vmem %s11, %s415
      %p417 = scmp.lt.s32.totalorder %s23, 1
      %s418 = scalar_select %p417, %s23, 1
      %s419 = smul.addr %s418, 8
      %s420 = scalar_lea.vmem %s0, %s419
      %p421 = scmp.lt.s32.totalorder %s23, 1
      %s422 = scalar_select %p421, %s23, 1
      %s423 = smul.addr %s422, 8
      %s424 = scalar_lea.vmem %s1, %s423
      %p425 = scmp.lt.s32.totalorder %s23, 1
      %s426 = scalar_select %p425, %s23, 1
      %s427 = scalar_lea.vmem %s2, %s426
      %p428 = scmp.lt.s32.totalorder %s23, 1
      %s429 = scalar_select %p428, %s23, 1
      %s430 = smul.addr %s429, 8
      %s431 = scalar_lea.vmem %s3, %s430
      %p432 = scmp.lt.s32.totalorder %s23, 1
      %s433 = scalar_select %p432, %s23, 1
      %s434 = scalar_lea.vmem %s10, %s433
      %p435 = scmp.lt.s32.totalorder %s23, 1
      %s436 = scalar_select %p435, %s23, 1
      %s437 = smul.addr %s436, 8
      %s438 = scalar_lea.vmem %s11, %s437
      %v440 = vld [vmem:[%s4] sm:$0xf]
      %v441 = vld [vmem:[%s4 + $0x4] sm:$0xf]
      %v442 = vld [vmem:[%s4 + $0x8] sm:$0x7]
      %v443 = vld [vmem:[%s4 + $0xc] sm:$0xf]
      %v444 = vld [vmem:[%s4 + $0x10] sm:$0xf]
      %v445 = vld [vmem:[%s4 + $0x14] sm:$0xf]
      %v446 = vld [vmem:[%s4 + $0x18] sm:$0xf]
      %v447 = vld [vmem:[%s4 + $0x1c] sm:$0xf]
      %v448 = vld [vmem:[%s4 + $0x20] sm:$0xf]
      %v449 = vld [vmem:[%s4 + $0x24] sm:$0xf]
      %v450 = vld [vmem:[%s4 + $0x28] sm:$0xf]
      %v451 = vld [vmem:[%s4 + $0x2c] sm:$0xf]
      %v452 = vld [vmem:[%s4 + $0x30] sm:$0xf]
      %v453 = vld [vmem:[%s4 + $0x34] sm:$0xf]
      %v454 = vld [vmem:[%s4 + $0x38] sm:$0xf]
      %v455 = vld [vmem:[%s4 + $0x3c] sm:$0xf]
      %v456 = vld [vmem:[%s4 + $0x40] sm:$0xf]
      %v457 = vld [vmem:[%s4 + $0x44] sm:$0xf]
      %v458 = vld [vmem:[%s4 + $0x48] sm:$0xf]
      %v459 = vld [vmem:[%s4 + $0x4c] sm:$0xf]
      %v460 = vld [vmem:[%s4 + $0x50] sm:$0xf]
      %v461 = vld [vmem:[%s4 + $0x54] sm:$0xf]
      %v462 = vld [vmem:[%s420] sm:$0xff]
      %v463 = vpack.c.bf16 %v462, %v462
      %v464 = vld [vmem:[%s7] sm:$0x1]
      %v465 = vlaneseq
      %v466 = vshrl.u32 %v465, 7
      %v467 = vsub.s32 0, %v466
      %v468 = vrot.slane %v464, %v467
      %v472 = vunpack.c.l.b16 %v440
      %v473 = vunpack.c.l.b16 %v441
      %v474 = vunpack.c.l.b16 %v442
      %v475 = vpack.c.b16 %v473, %v472
      %v476 = vpack.c.b16 %v474, %v474
      %vm478 = vcmask 171008
      %v480 = vsel %vm478, %v463, 0
      %vm482 = vcmask 1041408
      %vm483 = vcmask 1042432
      %v484 = vsel %vm482, 4294967295, 65535
      %v485 = vsel %vm483, %v484, 0
      %v487 = vand.u32 %v476, %v485
      %489 = vmatprep.subr.bf16.mxu0 0
      %490 = vmatpush1.bf16.msra.mxu0 %v475
      %491 = vmatprep.subr.bf16.mxu0 0
      %492 = vmatpush1.bf16.msra.mxu0 %v487
      %493 = vmatprep.subr.bf16.mxu0 0
      %494 = vmatpush1.bf16.msra.mxu0 0
      %495 = vmatprep.subr.bf16.mxu0 0
      %496 = vmatpush1.bf16.msra.mxu0 0
      %497 = vmatprep.subr.bf16.mxu0 0
      %498 = vmatpush1.bf16.msra.mxu0 0
      %499 = vmatprep.subr.bf16.mxu0 0
      %500 = vmatpush1.bf16.msra.mxu0 0
      %501 = vmatprep.subr.bf16.mxu0 0
      %502 = vmatpush1.bf16.msra.mxu0 0
      %503 = vmatprep.subr.bf16.mxu0 0
      %504 = vmatpush1.bf16.msra.mxu0 0
      %505 = vmatprep.subr.bf16.mxu0 0
      %506 = vmatpush1.bf16.msra.mxu0 0
      %507 = vmatprep.subr.bf16.mxu0 0
      %508 = vmatpush1.bf16.msra.mxu0 0
      %509 = vmatprep.subr.bf16.mxu0 0
      %510 = vmatpush1.bf16.msra.mxu0 0
      %511 = vmatprep.subr.bf16.mxu0 0
      %512 = vmatpush1.bf16.msra.mxu0 0
      %513 = vmatprep.subr.bf16.mxu0 0
      %514 = vmatpush1.bf16.msra.mxu0 0
      %515 = vmatprep.subr.bf16.mxu0 0
      %516 = vmatpush1.bf16.msra.mxu0 0
      %517 = vmatprep.subr.bf16.mxu0 0
      %518 = vmatpush1.bf16.msra.mxu0 0
      %519 = vmatprep.subr.bf16.mxu0 0
      %520 = vmatpush1.bf16.msra.mxu0 0
      %521 = vmatprep.mubr.bf16.mxu0 0
      %522 = vmatmul.mubr.bf16.gmra.mrb[0].mxu0 %v480
      %v523 = vpop.f32.mrb[0].mxu0
      %v524 = vadd.f32 %v468, %v523
      %v525 = vpop.f32.mrb[0].mxu0
      %v526 = vpop.f32.mrb[0].mxu0
      %v527 = vpop.f32.mrb[0].mxu0
      %528 = vdwg.mxu0
      %v529 = vmax.f32 %v524, 0.0
      %v530 = vpack.c.bf16 %v529, %v529
      %v531 = vld [vmem:[%s7 + $0x1] sm:$0x1]
      %v532 = vlaneseq
      %v533 = vshrl.u32 %v532, 7
      %v534 = vsub.s32 0, %v533
      %v535 = vrot.slane %v531, %v534
      %v540 = vunpack.c.l.b16 %v443
      %v541 = vunpack.c.l.b16 %v444
      %v542 = vunpack.c.l.b16 %v445
      %v543 = vunpack.c.l.b16 %v446
      %v544 = vpack.c.b16 %v541, %v540
      %v545 = vpack.c.b16 %v543, %v542
      %vm548 = vcmask 261120
      %v550 = vsel %vm548, %v530, 0
      %552 = vmatprep.subr.bf16.mxu0 0
      %553 = vmatpush1.bf16.msra.mxu0 %v544
      %554 = vmatprep.subr.bf16.mxu0 0
      %555 = vmatpush1.bf16.msra.mxu0 %v545
      %556 = vmatprep.subr.bf16.mxu0 0
      %557 = vmatpush1.bf16.msra.mxu0 0
      %558 = vmatprep.subr.bf16.mxu0 0
      %559 = vmatpush1.bf16.msra.mxu0 0
      %560 = vmatprep.subr.bf16.mxu0 0
      %561 = vmatpush1.bf16.msra.mxu0 0
      %562 = vmatprep.subr.bf16.mxu0 0
      %563 = vmatpush1.bf16.msra.mxu0 0
      %564 = vmatprep.subr.bf16.mxu0 0
      %565 = vmatpush1.bf16.msra.mxu0 0
      %566 = vmatprep.subr.bf16.mxu0 0
      %567 = vmatpush1.bf16.msra.mxu0 0
      %568 = vmatprep.subr.bf16.mxu0 0
      %569 = vmatpush1.bf16.msra.mxu0 0
      %570 = vmatprep.subr.bf16.mxu0 0
      %571 = vmatpush1.bf16.msra.mxu0 0
      %572 = vmatprep.subr.bf16.mxu0 0
      %573 = vmatpush1.bf16.msra.mxu0 0
      %574 = vmatprep.subr.bf16.mxu0 0
      %575 = vmatpush1.bf16.msra.mxu0 0
      %576 = vmatprep.subr.bf16.mxu0 0
      %577 = vmatpush1.bf16.msra.mxu0 0
      %578 = vmatprep.subr.bf16.mxu0 0
      %579 = vmatpush1.bf16.msra.mxu0 0
      %580 = vmatprep.subr.bf16.mxu0 0
      %581 = vmatpush1.bf16.msra.mxu0 0
      %582 = vmatprep.subr.bf16.mxu0 0
      %583 = vmatpush1.bf16.msra.mxu0 0
      %584 = vmatprep.mubr.bf16.mxu0 0
      %585 = vmatmul.mubr.bf16.gmra.mrb[0].mxu0 %v550
      %v586 = vpop.f32.mrb[0].mxu0
      %v587 = vadd.f32 %v535, %v586
      %v588 = vpop.f32.mrb[0].mxu0
      %v589 = vpop.f32.mrb[0].mxu0
      %v590 = vpop.f32.mrb[0].mxu0
      %591 = vdwg.mxu0
      %v592 = vmax.f32 %v587, 0.0
      %v593 = vpack.c.bf16 %v592, %v592
      %v594 = vld [vmem:[%s7 + $0x2] sm:$0x1]
      %v595 = vlaneseq
      %v596 = vshrl.u32 %v595, 7
      %v597 = vsub.s32 0, %v596
      %v598 = vrot.slane %v594, %v597
      %v603 = vunpack.c.l.b16 %v447
      %v604 = vunpack.c.l.b16 %v448
      %v605 = vunpack.c.l.b16 %v449
      %v606 = vunpack.c.l.b16 %v450
      %v607 = vpack.c.b16 %v604, %v603
      %v608 = vpack.c.b16 %v606, %v605
      %v612 = vsel %vm548, %v593, 0
      %614 = vmatprep.subr.bf16.mxu0 0
      %615 = vmatpush1.bf16.msra.mxu0 %v607
      %616 = vmatprep.subr.bf16.mxu0 0
      %617 = vmatpush1.bf16.msra.mxu0 %v608
      %618 = vmatprep.subr.bf16.mxu0 0
      %619 = vmatpush1.bf16.msra.mxu0 0
      %620 = vmatprep.subr.bf16.mxu0 0
      %621 = vmatpush1.bf16.msra.mxu0 0
      %622 = vmatprep.subr.bf16.mxu0 0
      %623 = vmatpush1.bf16.msra.mxu0 0
      %624 = vmatprep.subr.bf16.mxu0 0
      %625 = vmatpush1.bf16.msra.mxu0 0
      %626 = vmatprep.subr.bf16.mxu0 0
      %627 = vmatpush1.bf16.msra.mxu0 0
      %628 = vmatprep.subr.bf16.mxu0 0
      %629 = vmatpush1.bf16.msra.mxu0 0
      %630 = vmatprep.subr.bf16.mxu0 0
      %631 = vmatpush1.bf16.msra.mxu0 0
      %632 = vmatprep.subr.bf16.mxu0 0
      %633 = vmatpush1.bf16.msra.mxu0 0
      %634 = vmatprep.subr.bf16.mxu0 0
      %635 = vmatpush1.bf16.msra.mxu0 0
      %636 = vmatprep.subr.bf16.mxu0 0
      %637 = vmatpush1.bf16.msra.mxu0 0
      %638 = vmatprep.subr.bf16.mxu0 0
      %639 = vmatpush1.bf16.msra.mxu0 0
      %640 = vmatprep.subr.bf16.mxu0 0
      %641 = vmatpush1.bf16.msra.mxu0 0
      %642 = vmatprep.subr.bf16.mxu0 0
      %643 = vmatpush1.bf16.msra.mxu0 0
      %644 = vmatprep.subr.bf16.mxu0 0
      %645 = vmatpush1.bf16.msra.mxu0 0
      %646 = vmatprep.mubr.bf16.mxu0 0
      %647 = vmatmul.mubr.bf16.gmra.mrb[0].mxu0 %v612
      %v648 = vpop.f32.mrb[0].mxu0
      %v649 = vadd.f32 %v598, %v648
      %v650 = vpop.f32.mrb[0].mxu0
      %v651 = vpop.f32.mrb[0].mxu0
      %v652 = vpop.f32.mrb[0].mxu0
      %653 = vdwg.mxu0
      %v654 = vmax.f32 %v649, 0.0
      %v655 = vld [vmem:[%s5] sm:$0xf]
      %v656 = vld [vmem:[%s5 + $0x4] sm:$0xf]
      %v657 = vld [vmem:[%s5 + $0x8] sm:$0xf]
      %v658 = vld [vmem:[%s5 + $0xc] sm:$0xf]
      %v659 = vpack.c.bf16 %v654, %v654
      %v660 = vld [vmem:[%s8] sm:$0x1]
      %v661 = vlaneseq
      %v662 = vshrl.u32 %v661, 7
      %v663 = vsub.s32 0, %v662
      %v664 = vrot.slane %v660, %v663
      %v669 = vunpack.c.l.b16 %v655
      %v670 = vunpack.c.l.b16 %v656
      %v671 = vunpack.c.l.b16 %v657
      %v672 = vunpack.c.l.b16 %v658
      %v673 = vpack.c.b16 %v670, %v669
      %v674 = vpack.c.b16 %v672, %v671
      %v678 = vsel %vm548, %v659, 0
      %680 = vmatprep.subr.bf16.mxu0 0
      %681 = vmatpush1.bf16.msra.mxu0 %v673
      %682 = vmatprep.subr.bf16.mxu0 0
      %683 = vmatpush1.bf16.msra.mxu0 %v674
      %684 = vmatprep.subr.bf16.mxu0 0
      %685 = vmatpush1.bf16.msra.mxu0 0
      %686 = vmatprep.subr.bf16.mxu0 0
      %687 = vmatpush1.bf16.msra.mxu0 0
      %688 = vmatprep.subr.bf16.mxu0 0
      %689 = vmatpush1.bf16.msra.mxu0 0
      %690 = vmatprep.subr.bf16.mxu0 0
      %691 = vmatpush1.bf16.msra.mxu0 0
      %692 = vmatprep.subr.bf16.mxu0 0
      %693 = vmatpush1.bf16.msra.mxu0 0
      %694 = vmatprep.subr.bf16.mxu0 0
      %695 = vmatpush1.bf16.msra.mxu0 0
      %696 = vmatprep.subr.bf16.mxu0 0
      %697 = vmatpush1.bf16.msra.mxu0 0
      %698 = vmatprep.subr.bf16.mxu0 0
      %699 = vmatpush1.bf16.msra.mxu0 0
      %700 = vmatprep.subr.bf16.mxu0 0
      %701 = vmatpush1.bf16.msra.mxu0 0
      %702 = vmatprep.subr.bf16.mxu0 0
      %703 = vmatpush1.bf16.msra.mxu0 0
      %704 = vmatprep.subr.bf16.mxu0 0
      %705 = vmatpush1.bf16.msra.mxu0 0
      %706 = vmatprep.subr.bf16.mxu0 0
      %707 = vmatpush1.bf16.msra.mxu0 0
      %708 = vmatprep.subr.bf16.mxu0 0
      %709 = vmatpush1.bf16.msra.mxu0 0
      %710 = vmatprep.subr.bf16.mxu0 0
      %711 = vmatpush1.bf16.msra.mxu0 0
      %712 = vmatprep.mubr.bf16.mxu0 0
      %713 = vmatmul.mubr.bf16.gmra.mrb[0].mxu0 %v678
      %v714 = vpop.f32.mrb[0].mxu0
      %v715 = vadd.f32 %v664, %v714
      %v716 = vpop.f32.mrb[0].mxu0
      %v717 = vpop.f32.mrb[0].mxu0
      %v718 = vpop.f32.mrb[0].mxu0
      %719 = vdwg.mxu0
      %v720 = vld [vmem:[%s5 + $0x10] sm:$0xf]
      %v721 = vld [vmem:[%s5 + $0x14] sm:$0xf]
      %v722 = vld [vmem:[%s5 + $0x18] sm:$0xf]
      %v723 = vld [vmem:[%s5 + $0x1c] sm:$0xf]
      %v724 = vld [vmem:[%s8 + $0x1] sm:$0x1]
      %v725 = vlaneseq
      %v726 = vshrl.u32 %v725, 7
      %v727 = vsub.s32 0, %v726
      %v728 = vrot.slane %v724, %v727
      %v733 = vunpack.c.l.b16 %v720
      %v734 = vunpack.c.l.b16 %v721
      %v735 = vunpack.c.l.b16 %v722
      %v736 = vunpack.c.l.b16 %v723
      %v737 = vpack.c.b16 %v734, %v733
      %v738 = vpack.c.b16 %v736, %v735
      %741 = vmatprep.subr.bf16.mxu0 0
      %742 = vmatpush1.bf16.msra.mxu0 %v737
      %743 = vmatprep.subr.bf16.mxu0 0
      %744 = vmatpush1.bf16.msra.mxu0 %v738
      %745 = vmatprep.subr.bf16.mxu0 0
      %746 = vmatpush1.bf16.msra.mxu0 0
      %747 = vmatprep.subr.bf16.mxu0 0
      %748 = vmatpush1.bf16.msra.mxu0 0
      %749 = vmatprep.subr.bf16.mxu0 0
      %750 = vmatpush1.bf16.msra.mxu0 0
      %751 = vmatprep.subr.bf16.mxu0 0
      %752 = vmatpush1.bf16.msra.mxu0 0
      %753 = vmatprep.subr.bf16.mxu0 0
      %754 = vmatpush1.bf16.msra.mxu0 0
      %755 = vmatprep.subr.bf16.mxu0 0
      %756 = vmatpush1.bf16.msra.mxu0 0
      %757 = vmatprep.subr.bf16.mxu0 0
      %758 = vmatpush1.bf16.msra.mxu0 0
      %759 = vmatprep.subr.bf16.mxu0 0
      %760 = vmatpush1.bf16.msra.mxu0 0
      %761 = vmatprep.subr.bf16.mxu0 0
      %762 = vmatpush1.bf16.msra.mxu0 0
      %763 = vmatprep.subr.bf16.mxu0 0
      %764 = vmatpush1.bf16.msra.mxu0 0
      %765 = vmatprep.subr.bf16.mxu0 0
      %766 = vmatpush1.bf16.msra.mxu0 0
      %767 = vmatprep.subr.bf16.mxu0 0
      %768 = vmatpush1.bf16.msra.mxu0 0
      %769 = vmatprep.subr.bf16.mxu0 0
      %770 = vmatpush1.bf16.msra.mxu0 0
      %771 = vmatprep.subr.bf16.mxu0 0
      %772 = vmatpush1.bf16.msra.mxu0 0
      %773 = vmatprep.mubr.bf16.mxu0 0
      %774 = vmatmul.mubr.bf16.gmra.mrb[0].mxu0 %v678
      %v775 = vpop.f32.mrb[0].mxu0
      %v776 = vadd.f32 %v728, %v775
      %v777 = vpop.f32.mrb[0].mxu0
      %v778 = vpop.f32.mrb[0].mxu0
      %v779 = vpop.f32.mrb[0].mxu0
      %780 = vdwg.mxu0
      %vm781 = vcmp.gt.f32.partialorder %v776, 20.0
      %v782 = vmin.f32 %v776, 20.0
      %v783 = vmul.f32 %v782, 1.442695
      %v784 = vpow.pop %v783
      %v785 = vadd.f32 %v784, 1.0
      %v786 = vlog2.pop %v785
      %v787 = vmul.f32 %v786, 0.6931472
      %v788 = vmul.f32 -0.5, %v784
      %v789 = vadd.f32 %v788, 1.0
      %v790 = vmul.f32 %v789, %v784
      %v791 = vand.u32 2147483647, %v784
      %vm792 = vcmp.lt.f32.partialorder %v791, 0.0004427343
      %v793 = vsel %vm792, %v790, %v787
      %v794 = vsel %vm781, %v776, %v793
      %v795 = vmax.f32 %v794, 1e-07
      %v796 = vrcp.pop %v795
      %v797 = vmul.f32 1.0, %v796
      %vm798 = vcmask 64512
      %v799 = vsel %vm798, %v797, 0.0
      %v800 = vrot.slane %v799, 4
      %v801 = vadd.f32 %v799, %v800
      %v802 = vrot.slane %v801, 2
      %v803 = vadd.f32 %v801, %v802
      %v804 = vrot.slane %v803, 1
      %v805 = vadd.f32 %v803, %v804
      %v806 = vrcp.pop %v805
      %v807 = vmul.f32 1.0, %v806
      %v808 = vmul.f32 %v715, %v797
      %v809 = vsel %vm798, %v808, 0.0
      %v810 = vrot.slane %v809, 4
      %v811 = vadd.f32 %v809, %v810
      %v812 = vrot.slane %v811, 2
      %v813 = vadd.f32 %v811, %v812
      %v814 = vrot.slane %v813, 1
      %v815 = vadd.f32 %v813, %v814
      %v816 = vmul.f32 %v807, %v815
      %v817 = vrsqrt.pop %v807
      %v818 = vmul.f32 %v807, %v817
      %vm819 = vcmp.eq.f32.partialorder %v807, inf
      %v820 = vsel %vm819, %v807, %v818
      %vm821 = vcmp.eq.f32.partialorder %v807, 0.0
      %v822 = vand.u32 %v807, 2147483648
      %v823 = vsel %vm821, %v822, %v820
      %v824 = vld [vmem:[%s427] sm:$0x1]
      %v825 = vmul.f32 %v823, %v824
      %v826 = vadd.f32 %v816, %v825
      %828 = vrot.lane.b32.xlu0 %v807, 8
      %v829 = vpop.permute.xlu0 %828
      %832 = vrot.lane.b32.xlu0 %v826, 16
      %v833 = vpop.permute.xlu0 %832
      %v835 = vsel %vm798, %v816, %v829
      %vm836 = vcmask 130048
      %v837 = vsel %vm836, %v835, %v833
      %vm838 = vcmask 188416
      %839 = vst.msk [vmem:[%s434] sm:$0x1] %vm838, %v837
      %v840 = vld [vmem:[%s424] sm:$0xff]
      %v841 = vpack.c.bf16 %v840, %v840
      %v842 = vpack.c.bf16 %v826, %v826
      %v844 = vsel %vm798, %v842, 0
      %vm846 = vcmask 1043456
      %v848 = vsel %vm846, %v453, 0
      %850 = vmatprep.subr.bf16.mxu0 0
      %851 = vmatpush1.bf16.msra.mxu0 %v848
      %852 = vmatprep.subr.bf16.mxu0 0
      %853 = vmatpush1.bf16.msra.mxu0 0
      %854 = vmatprep.subr.bf16.mxu0 0
      %855 = vmatpush1.bf16.msra.mxu0 0
      %856 = vmatprep.subr.bf16.mxu0 0
      %857 = vmatpush1.bf16.msra.mxu0 0
      %858 = vmatprep.subr.bf16.mxu0 0
      %859 = vmatpush1.bf16.msra.mxu0 0
      %860 = vmatprep.subr.bf16.mxu0 0
      %861 = vmatpush1.bf16.msra.mxu0 0
      %862 = vmatprep.subr.bf16.mxu0 0
      %863 = vmatpush1.bf16.msra.mxu0 0
      %864 = vmatprep.subr.bf16.mxu0 0
      %865 = vmatpush1.bf16.msra.mxu0 0
      %866 = vmatprep.subr.bf16.mxu0 0
      %867 = vmatpush1.bf16.msra.mxu0 0
      %868 = vmatprep.subr.bf16.mxu0 0
      %869 = vmatpush1.bf16.msra.mxu0 0
      %870 = vmatprep.subr.bf16.mxu0 0
      %871 = vmatpush1.bf16.msra.mxu0 0
      %872 = vmatprep.subr.bf16.mxu0 0
      %873 = vmatpush1.bf16.msra.mxu0 0
      %874 = vmatprep.subr.bf16.mxu0 0
      %875 = vmatpush1.bf16.msra.mxu0 0
      %876 = vmatprep.subr.bf16.mxu0 0
      %877 = vmatpush1.bf16.msra.mxu0 0
      %878 = vmatprep.subr.bf16.mxu0 0
      %879 = vmatpush1.bf16.msra.mxu0 0
      %880 = vmatprep.subr.bf16.mxu0 0
      %881 = vmatpush1.bf16.msra.mxu0 0
      %882 = vmatprep.mubr.bf16.mxu0 0
      %883 = vmatmul.mubr.bf16.gmra.mrb[0].mxu0 %v844
      %v884 = vpop.f32.mrb[0].mxu0
      %v885 = vadd.f32 0.0, %v884
      %v886 = vpop.f32.mrb[0].mxu0
      %v887 = vpop.f32.mrb[0].mxu0
      %v888 = vpop.f32.mrb[0].mxu0
      %889 = vdwg.mxu0
      %v890 = vlaneseq
      %v891 = vshrl.u32 %v890, 7
      %v892 = vsub.s32 0, %v891
      %v893 = vrot.slane %v885, %v892
      %v896 = vunpack.c.l.b16 %v451
      %v897 = vunpack.c.l.b16 %v452
      %v898 = vpack.c.b16 %v897, %v896
      %v901 = vsel %vm836, %v841, 0
      %903 = vmatprep.subr.bf16.mxu0 0
      %904 = vmatpush1.bf16.msra.mxu0 %v898
      %905 = vmatprep.subr.bf16.mxu0 0
      %906 = vmatpush1.bf16.msra.mxu0 0
      %907 = vmatprep.subr.bf16.mxu0 0
      %908 = vmatpush1.bf16.msra.mxu0 0
      %909 = vmatprep.subr.bf16.mxu0 0
      %910 = vmatpush1.bf16.msra.mxu0 0
      %911 = vmatprep.subr.bf16.mxu0 0
      %912 = vmatpush1.bf16.msra.mxu0 0
      %913 = vmatprep.subr.bf16.mxu0 0
      %914 = vmatpush1.bf16.msra.mxu0 0
      %915 = vmatprep.subr.bf16.mxu0 0
      %916 = vmatpush1.bf16.msra.mxu0 0
      %917 = vmatprep.subr.bf16.mxu0 0
      %918 = vmatpush1.bf16.msra.mxu0 0
      %919 = vmatprep.subr.bf16.mxu0 0
      %920 = vmatpush1.bf16.msra.mxu0 0
      %921 = vmatprep.subr.bf16.mxu0 0
      %922 = vmatpush1.bf16.msra.mxu0 0
      %923 = vmatprep.subr.bf16.mxu0 0
      %924 = vmatpush1.bf16.msra.mxu0 0
      %925 = vmatprep.subr.bf16.mxu0 0
      %926 = vmatpush1.bf16.msra.mxu0 0
      %927 = vmatprep.subr.bf16.mxu0 0
      %928 = vmatpush1.bf16.msra.mxu0 0
      %929 = vmatprep.subr.bf16.mxu0 0
      %930 = vmatpush1.bf16.msra.mxu0 0
      %931 = vmatprep.subr.bf16.mxu0 0
      %932 = vmatpush1.bf16.msra.mxu0 0
      %933 = vmatprep.subr.bf16.mxu0 0
      %934 = vmatpush1.bf16.msra.mxu0 0
      %935 = vmatprep.mubr.bf16.mxu0 0
      %936 = vmatmul.mubr.bf16.gmra.mrb[0].mxu0 %v901
      %v937 = vpop.f32.mrb[0].mxu0
      %v938 = vadd.f32 %v893, %v937
      %v939 = vpop.f32.mrb[0].mxu0
      %v940 = vpop.f32.mrb[0].mxu0
      %v941 = vpop.f32.mrb[0].mxu0
      %942 = vdwg.mxu0
      %v943 = vld [vmem:[%s7 + $0x3] sm:$0x1]
      %v944 = vlaneseq
      %v945 = vshrl.u32 %v944, 7
      %v946 = vsub.s32 0, %v945
      %v947 = vrot.slane %v943, %v946
      %v948 = vadd.f32 %v938, %v947
      %v949 = vmax.f32 %v948, 0.0
      %v950 = vpack.c.bf16 %v949, %v949
      %v951 = vld [vmem:[%s7 + $0x4] sm:$0x1]
      %v952 = vlaneseq
      %v953 = vshrl.u32 %v952, 7
      %v954 = vsub.s32 0, %v953
      %v955 = vrot.slane %v951, %v954
      %v960 = vunpack.c.l.b16 %v454
      %v961 = vunpack.c.l.b16 %v455
      %v962 = vunpack.c.l.b16 %v456
      %v963 = vunpack.c.l.b16 %v457
      %v964 = vpack.c.b16 %v961, %v960
      %v965 = vpack.c.b16 %v963, %v962
      %v969 = vsel %vm548, %v950, 0
      %971 = vmatprep.subr.bf16.mxu0 0
      %972 = vmatpush1.bf16.msra.mxu0 %v964
      %973 = vmatprep.subr.bf16.mxu0 0
      %974 = vmatpush1.bf16.msra.mxu0 %v965
      %975 = vmatprep.subr.bf16.mxu0 0
      %976 = vmatpush1.bf16.msra.mxu0 0
      %977 = vmatprep.subr.bf16.mxu0 0
      %978 = vmatpush1.bf16.msra.mxu0 0
      %979 = vmatprep.subr.bf16.mxu0 0
      %980 = vmatpush1.bf16.msra.mxu0 0
      %981 = vmatprep.subr.bf16.mxu0 0
      %982 = vmatpush1.bf16.msra.mxu0 0
      %983 = vmatprep.subr.bf16.mxu0 0
      %984 = vmatpush1.bf16.msra.mxu0 0
      %985 = vmatprep.subr.bf16.mxu0 0
      %986 = vmatpush1.bf16.msra.mxu0 0
      %987 = vmatprep.subr.bf16.mxu0 0
      %988 = vmatpush1.bf16.msra.mxu0 0
      %989 = vmatprep.subr.bf16.mxu0 0
      %990 = vmatpush1.bf16.msra.mxu0 0
      %991 = vmatprep.subr.bf16.mxu0 0
      %992 = vmatpush1.bf16.msra.mxu0 0
      %993 = vmatprep.subr.bf16.mxu0 0
      %994 = vmatpush1.bf16.msra.mxu0 0
      %995 = vmatprep.subr.bf16.mxu0 0
      %996 = vmatpush1.bf16.msra.mxu0 0
      %997 = vmatprep.subr.bf16.mxu0 0
      %998 = vmatpush1.bf16.msra.mxu0 0
      %999 = vmatprep.subr.bf16.mxu0 0
      %1000 = vmatpush1.bf16.msra.mxu0 0
      %1001 = vmatprep.subr.bf16.mxu0 0
      %1002 = vmatpush1.bf16.msra.mxu0 0
      %1003 = vmatprep.mubr.bf16.mxu0 0
      %1004 = vmatmul.mubr.bf16.gmra.mrb[0].mxu0 %v969
      %v1005 = vpop.f32.mrb[0].mxu0
      %v1006 = vadd.f32 %v955, %v1005
      %v1007 = vpop.f32.mrb[0].mxu0
      %v1008 = vpop.f32.mrb[0].mxu0
      %v1009 = vpop.f32.mrb[0].mxu0
      %1010 = vdwg.mxu0
      %v1011 = vmax.f32 %v1006, 0.0
      %v1012 = vpack.c.bf16 %v1011, %v1011
      %v1013 = vld [vmem:[%s7 + $0x5] sm:$0x1]
      %v1014 = vlaneseq
      %v1015 = vshrl.u32 %v1014, 7
      %v1016 = vsub.s32 0, %v1015
      %v1017 = vrot.slane %v1013, %v1016
      %v1022 = vunpack.c.l.b16 %v458
      %v1023 = vunpack.c.l.b16 %v459
      %v1024 = vunpack.c.l.b16 %v460
      %v1025 = vunpack.c.l.b16 %v461
      %v1026 = vpack.c.b16 %v1023, %v1022
      %v1027 = vpack.c.b16 %v1025, %v1024
      %v1031 = vsel %vm548, %v1012, 0
      %1033 = vmatprep.subr.bf16.mxu0 0
      %1034 = vmatpush1.bf16.msra.mxu0 %v1026
      %1035 = vmatprep.subr.bf16.mxu0 0
      %1036 = vmatpush1.bf16.msra.mxu0 %v1027
      %1037 = vmatprep.subr.bf16.mxu0 0
      %1038 = vmatpush1.bf16.msra.mxu0 0
      %1039 = vmatprep.subr.bf16.mxu0 0
      %1040 = vmatpush1.bf16.msra.mxu0 0
      %1041 = vmatprep.subr.bf16.mxu0 0
      %1042 = vmatpush1.bf16.msra.mxu0 0
      %1043 = vmatprep.subr.bf16.mxu0 0
      %1044 = vmatpush1.bf16.msra.mxu0 0
      %1045 = vmatprep.subr.bf16.mxu0 0
      %1046 = vmatpush1.bf16.msra.mxu0 0
      %1047 = vmatprep.subr.bf16.mxu0 0
      %1048 = vmatpush1.bf16.msra.mxu0 0
      %1049 = vmatprep.subr.bf16.mxu0 0
      %1050 = vmatpush1.bf16.msra.mxu0 0
      %1051 = vmatprep.subr.bf16.mxu0 0
      %1052 = vmatpush1.bf16.msra.mxu0 0
      %1053 = vmatprep.subr.bf16.mxu0 0
      %1054 = vmatpush1.bf16.msra.mxu0 0
      %1055 = vmatprep.subr.bf16.mxu0 0
      %1056 = vmatpush1.bf16.msra.mxu0 0
      %1057 = vmatprep.subr.bf16.mxu0 0
      %1058 = vmatpush1.bf16.msra.mxu0 0
      %1059 = vmatprep.subr.bf16.mxu0 0
      %1060 = vmatpush1.bf16.msra.mxu0 0
      %1061 = vmatprep.subr.bf16.mxu0 0
      %1062 = vmatpush1.bf16.msra.mxu0 0
      %1063 = vmatprep.subr.bf16.mxu0 0
      %1064 = vmatpush1.bf16.msra.mxu0 0
      %1065 = vmatprep.mubr.bf16.mxu0 0
      %1066 = vmatmul.mubr.bf16.gmra.mrb[0].mxu0 %v1031
      %v1067 = vpop.f32.mrb[0].mxu0
      %v1068 = vadd.f32 %v1017, %v1067
      %v1069 = vpop.f32.mrb[0].mxu0
      %v1070 = vpop.f32.mrb[0].mxu0
      %v1071 = vpop.f32.mrb[0].mxu0
      %1072 = vdwg.mxu0
      %v1073 = vmax.f32 %v1068, 0.0
      %v1074 = vld [vmem:[%s6] sm:$0xf]
      %v1075 = vld [vmem:[%s6 + $0x4] sm:$0xf]
      %v1076 = vld [vmem:[%s6 + $0x8] sm:$0xf]
      %v1077 = vld [vmem:[%s6 + $0xc] sm:$0xf]
      %v1078 = vpack.c.bf16 %v1073, %v1073
      %v1079 = vld [vmem:[%s9] sm:$0x1]
      %v1080 = vlaneseq
      %v1081 = vshrl.u32 %v1080, 7
      %v1082 = vsub.s32 0, %v1081
      %v1083 = vrot.slane %v1079, %v1082
      %v1088 = vunpack.c.l.b16 %v1074
      %v1089 = vunpack.c.l.b16 %v1075
      %v1090 = vunpack.c.l.b16 %v1076
      %v1091 = vunpack.c.l.b16 %v1077
      %v1092 = vpack.c.b16 %v1089, %v1088
      %v1093 = vpack.c.b16 %v1091, %v1090
      %v1097 = vsel %vm548, %v1078, 0
      %1099 = vmatprep.subr.bf16.mxu0 0
      %1100 = vmatpush1.bf16.msra.mxu0 %v1092
      %1101 = vmatprep.subr.bf16.mxu0 0
      %1102 = vmatpush1.bf16.msra.mxu0 %v1093
      %1103 = vmatprep.subr.bf16.mxu0 0
      %1104 = vmatpush1.bf16.msra.mxu0 0
      %1105 = vmatprep.subr.bf16.mxu0 0
      %1106 = vmatpush1.bf16.msra.mxu0 0
      %1107 = vmatprep.subr.bf16.mxu0 0
      %1108 = vmatpush1.bf16.msra.mxu0 0
      %1109 = vmatprep.subr.bf16.mxu0 0
      %1110 = vmatpush1.bf16.msra.mxu0 0
      %1111 = vmatprep.subr.bf16.mxu0 0
      %1112 = vmatpush1.bf16.msra.mxu0 0
      %1113 = vmatprep.subr.bf16.mxu0 0
      %1114 = vmatpush1.bf16.msra.mxu0 0
      %1115 = vmatprep.subr.bf16.mxu0 0
      %1116 = vmatpush1.bf16.msra.mxu0 0
      %1117 = vmatprep.subr.bf16.mxu0 0
      %1118 = vmatpush1.bf16.msra.mxu0 0
      %1119 = vmatprep.subr.bf16.mxu0 0
      %1120 = vmatpush1.bf16.msra.mxu0 0
      %1121 = vmatprep.subr.bf16.mxu0 0
      %1122 = vmatpush1.bf16.msra.mxu0 0
      %1123 = vmatprep.subr.bf16.mxu0 0
      %1124 = vmatpush1.bf16.msra.mxu0 0
      %1125 = vmatprep.subr.bf16.mxu0 0
      %1126 = vmatpush1.bf16.msra.mxu0 0
      %1127 = vmatprep.subr.bf16.mxu0 0
      %1128 = vmatpush1.bf16.msra.mxu0 0
      %1129 = vmatprep.subr.bf16.mxu0 0
      %1130 = vmatpush1.bf16.msra.mxu0 0
      %1131 = vmatprep.mubr.bf16.mxu0 0
      %1132 = vmatmul.mubr.bf16.gmra.mrb[0].mxu0 %v1097
      %v1133 = vpop.f32.mrb[0].mxu0
      %v1134 = vadd.f32 %v1083, %v1133
      %v1135 = vpop.f32.mrb[0].mxu0
      %v1136 = vpop.f32.mrb[0].mxu0
      %v1137 = vpop.f32.mrb[0].mxu0
      %1138 = vdwg.mxu0
      %v1139 = vld [vmem:[%s6 + $0x10] sm:$0xf]
      %v1140 = vld [vmem:[%s6 + $0x14] sm:$0xf]
      %v1141 = vld [vmem:[%s6 + $0x18] sm:$0xf]
      %v1142 = vld [vmem:[%s6 + $0x1c] sm:$0xf]
      %v1143 = vld [vmem:[%s9 + $0x1] sm:$0x1]
      %v1144 = vlaneseq
      %v1145 = vshrl.u32 %v1144, 7
      %v1146 = vsub.s32 0, %v1145
      %v1147 = vrot.slane %v1143, %v1146
      %v1152 = vunpack.c.l.b16 %v1139
      %v1153 = vunpack.c.l.b16 %v1140
      %v1154 = vunpack.c.l.b16 %v1141
      %v1155 = vunpack.c.l.b16 %v1142
      %v1156 = vpack.c.b16 %v1153, %v1152
      %v1157 = vpack.c.b16 %v1155, %v1154
      %1160 = vmatprep.subr.bf16.mxu0 0
      %1161 = vmatpush1.bf16.msra.mxu0 %v1156
      %1162 = vmatprep.subr.bf16.mxu0 0
      %1163 = vmatpush1.bf16.msra.mxu0 %v1157
      %1164 = vmatprep.subr.bf16.mxu0 0
      %1165 = vmatpush1.bf16.msra.mxu0 0
      %1166 = vmatprep.subr.bf16.mxu0 0
      %1167 = vmatpush1.bf16.msra.mxu0 0
      %1168 = vmatprep.subr.bf16.mxu0 0
      %1169 = vmatpush1.bf16.msra.mxu0 0
      %1170 = vmatprep.subr.bf16.mxu0 0
      %1171 = vmatpush1.bf16.msra.mxu0 0
      %1172 = vmatprep.subr.bf16.mxu0 0
      %1173 = vmatpush1.bf16.msra.mxu0 0
      %1174 = vmatprep.subr.bf16.mxu0 0
      %1175 = vmatpush1.bf16.msra.mxu0 0
      %1176 = vmatprep.subr.bf16.mxu0 0
      %1177 = vmatpush1.bf16.msra.mxu0 0
      %1178 = vmatprep.subr.bf16.mxu0 0
      %1179 = vmatpush1.bf16.msra.mxu0 0
      %1180 = vmatprep.subr.bf16.mxu0 0
      %1181 = vmatpush1.bf16.msra.mxu0 0
      %1182 = vmatprep.subr.bf16.mxu0 0
      %1183 = vmatpush1.bf16.msra.mxu0 0
      %1184 = vmatprep.subr.bf16.mxu0 0
      %1185 = vmatpush1.bf16.msra.mxu0 0
      %1186 = vmatprep.subr.bf16.mxu0 0
      %1187 = vmatpush1.bf16.msra.mxu0 0
      %1188 = vmatprep.subr.bf16.mxu0 0
      %1189 = vmatpush1.bf16.msra.mxu0 0
      %1190 = vmatprep.subr.bf16.mxu0 0
      %1191 = vmatpush1.bf16.msra.mxu0 0
      %1192 = vmatprep.mubr.bf16.mxu0 0
      %1193 = vmatmul.mubr.bf16.gmra.mrb[0].mxu0 %v1097
      %v1194 = vpop.f32.mrb[0].mxu0
      %v1195 = vadd.f32 %v1147, %v1194
      %v1196 = vpop.f32.mrb[0].mxu0
      %v1197 = vpop.f32.mrb[0].mxu0
      %v1198 = vpop.f32.mrb[0].mxu0
      %1199 = vdwg.mxu0
      %v1200 = vmax.f32 %v1195, -20.0
      %v1201 = vmin.f32 %v1200, 2.0
      %v1202 = vmul.f32 %v1201, 1.442695
      %v1203 = vpow.pop %v1202
      %v1204 = vld [vmem:[%s431] sm:$0xff]
      %v1205 = vmul.f32 %v1203, %v1204
      %v1206 = vadd.f32 %v1134, %v1205
      %v1207 = vtanh.pop %v1206
      %v1208 = vmul.f32 %v1204, -0.5
      %v1209 = vmul.f32 %v1208, %v1204
      %v1210 = vsub.f32 %v1209, %v1201
      %v1211 = vsub.f32 %v1210, 0.9189385
      %v1212 = vmul.f32 %v1207, %v1207
      %v1213 = vsub.f32 1.0, %v1212
      %v1214 = vadd.f32 %v1213, 1e-06
      %v1215 = vlog2.pop %v1214
      %v1216 = vmul.f32 %v1215, 0.6931472
      %v1217 = vsub.f32 %v1211, %v1216
      %vm1218 = vcmask 31744
      %v1219 = vsel %vm1218, %v1217, 0.0
      %1220 = vadd.xlane.f32.xlu0 %v1219
      %v1221 = vpop.xlane.xlu0 %1220
      %1223 = vrot.lane.b32.xlu0 %v1134, 4
      %v1224 = vpop.permute.xlu0 %1223
      %1227 = vrot.lane.b32.xlu0 %v1201, 8
      %v1228 = vpop.permute.xlu0 %1227
      %1231 = vrot.lane.b32.xlu0 %v1203, 12
      %v1232 = vpop.permute.xlu0 %1231
      %1235 = vrot.lane.b32.xlu0 %v1206, 16
      %v1236 = vpop.permute.xlu0 %1235
      %v1238 = vsel %vm1218, %v1207, %v1224
      %v1239 = vsel %vm798, %v1238, %v1228
      %vm1240 = vcmask 97280
      %v1241 = vsel %vm1240, %v1239, %v1232
      %v1242 = vsel %vm836, %v1241, %v1236
      %vm1243 = vcmask 162816
      %v1244 = vsel %vm1243, %v1242, %v1221
      %1245 = vst.msk [vmem:[%s438] sm:$0xff] %vm478, %v1244
      %p1246 = scmp.lt.s32.totalorder %s23, 1
      %s1247 = scalar_select %p1246, %s23, 1
      %s1248 = scalar_lea.vmem %s10, %s1247
      %p1249 = scmp.lt.s32.totalorder %s23, 1
      %s1250 = scalar_select %p1249, %s23, 1
      %s1251 = smul.addr %s1250, 8
      %s1252 = scalar_lea.vmem %s11, %s1251
      // Predicated region
      $region61: #{pearl_agent_forward.1} parent=59 // pred_check
        %p1253 = pneg %p271
      $region62: #{pearl_agent_forward.1} parent=59 // pred_check_branch
        %1255 = sbr.rel (%p1253) target = $region64
      $region63: #{pearl_agent_forward.1} parent=59 // pred_region
        _
      $region64: #{pearl_agent_forward.1} parent=59 // pred_fallthru
        _
      // Predicated region
      $region65: #{pearl_agent_forward.1} parent=59 // pred_check
        %p1256 = pneg %p297
      $region66: #{pearl_agent_forward.1} parent=59 // pred_check_branch
        %1258 = sbr.rel (%p1256) target = $region68
      $region67: #{pearl_agent_forward.1} parent=59 // pred_region
        _
      $region68: #{pearl_agent_forward.1} parent=59 // pred_fallthru
        _
    $region60: #{pearl_agent_forward.1} parent=5 // pred_fallthru
      _
    %p1259 = scmp.le.s32.totalorder 2, %s18
    // Predicated region
    $region69: #{pearl_agent_forward.1} parent=5 // pred_check
      %p1260 = pneg %p1259
    $region70: #{pearl_agent_forward.1} parent=5 // pred_check_branch
      %1262 = sbr.rel (%p1260) target = $region72
    $region71: #{pearl_agent_forward.1} parent=5 // pred_region
      %s1263 = ssub.s32 %s18, 2
      // Predicated region
      $region73: #{pearl_agent_forward.1} parent=71 // pred_check
        %p1264 = pneg %p277
      $region74: #{pearl_agent_forward.1} parent=71 // pred_check_branch
        %1266 = sbr.rel (%p1264) target = $region76
      $region75: #{pearl_agent_forward.1} parent=71 // pred_region
        %p1267 = scmp.lt.s32.totalorder %s24, 1
        %s1268 = scalar_select %p1267, %s24, 1
        %s1269 = scalar_lea.vmem %s10, %s1268
      $region76: #{pearl_agent_forward.1} parent=71 // pred_fallthru
        _
      // Predicated region
      $region77: #{pearl_agent_forward.1} parent=71 // pred_check
        %p1270 = pneg %p303
      $region78: #{pearl_agent_forward.1} parent=71 // pred_check_branch
        %1272 = sbr.rel (%p1270) target = $region80
      $region79: #{pearl_agent_forward.1} parent=71 // pred_region
        %p1273 = scmp.lt.s32.totalorder %s24, 1
        %s1274 = scalar_select %p1273, %s24, 1
        %s1275 = smul.addr %s1274, 8
        %s1276 = scalar_lea.vmem %s11, %s1275
      $region80: #{pearl_agent_forward.1} parent=71 // pred_fallthru
        _
    $region72: #{pearl_agent_forward.1} parent=5 // pred_fallthru
      _
  $region6: #{pearl_agent_forward.1} parent=0 // loop_footer
    %s22 = sadd.s32 1, %s18
  $region7: #{pearl_agent_forward.1} parent=0 // loop_footer_branch
    %17 = sbr.rel target = $region3
  $region8: #{pearl_agent_forward.1} parent=0 // loop_exit
    _

</llo_original>
